<compile_context>
chip_gen: v6e
topology: v6e:2x2x1
jax: 0.10.0
libtpu: 0.0.40
codegen_flags: <defaults>
</compile_context>

<pallas_src>
import functools

import jax
import jax.numpy as jnp
from jax.experimental import pallas as pl
from jax.experimental.pallas import tpu as pltpu


_BN_EPS = 1e-5
_SCALE = 0.66          # skip-connection scaling (glue between FTDNN layers)
_LANE = 128


def _round_up(n, m):
    return ((n + m - 1) // m) * m


# ----------------------------------------------------------------------------
# In-kernel helpers (traced inside the Pallas kernel)
# ----------------------------------------------------------------------------
def _shift_rows(x, d):
    """out[t] = x[t + d]; rows shifted past either end are zero.

    Row-granular (f32) sublane slice + concat — this realises the conv's
    zero time-padding entirely in-kernel, with no (R,R) selection matmuls and
    no host-side padding of the time axis."""
    if d == 0:
        return x
    T = x.shape[0]
    zeros = jnp.zeros((abs(d),) + x.shape[1:], x.dtype)
    if d > 0:
        return jnp.concatenate([x[d:], zeros], axis=0)
    return jnp.concatenate([zeros, x[:T + d]], axis=0)


def _conv_taps(x, taps):
    """Dilated 1-D conv (stride 1) as per-tap MXU matmuls accumulated in f32.

    x:    (T, C_in) f32 activation.
    taps: sequence of (time_offset, (C_in, C_out) bf16 weight).
    Each shifted copy is cast to bf16 right before its matmul (the shift is
    done in f32 for layout-safe row-granular slicing); accumulation is f32.
    """
    acc = None
    for d, w in taps:
        xs = _shift_rows(x, d).astype(jnp.bfloat16)
        y = jnp.dot(xs, w, preferred_element_type=jnp.float32)
        acc = y if acc is None else acc + y
    return acc


# ----------------------------------------------------------------------------
# The fused whole-network kernel (one grid step == one batch element)
# ----------------------------------------------------------------------------
def _tdnnf_fused_kernel(x_ref, iw_ref, ib_ref, is_ref, ih_ref,
                        w1_ref, w2_ref, w3_ref, bs_ref, bh_ref,
                        pw1_ref, pb1_ref, pw2_ref, pb2_ref, ps_ref, ph_ref,
                        o_ref, x_scr, res_scr, *, num_layers):
    # ---- input TdnnLayer: Conv1d(k=5, d=1, p=2) + bias -> ReLU -> BN affine
    x_in = x_ref[0]                                           # (T, 80) f32
    taps = [(d, iw_ref[k]) for k, d in enumerate((-2, -1, 0, 1, 2))]
    y = _conv_taps(x_in, taps) + ib_ref[...]
    y = jnp.maximum(y, 0.0)
    x_scr[...] = y * is_ref[...] + ih_ref[...]
    res_scr[...] = jnp.zeros_like(res_scr)    # skip term is 0 for the first layer

    # ---- FTDNNLayer stack (weights streamed by dynamic index, state in VMEM)
    # Each layer: factor1/factor2 (SOrthConv k=2, dil=2, pad=1, no bias),
    # factor3 (same conv shape) -> ReLU -> BN affine; Dropout(p=0.5) is
    # identity in eval mode.
    # TODO(synk): training-mode Dropout / BatchNorm batch statistics are not
    # reproduced; eval-mode semantics are used.
    @pl.loop(0, num_layers)
    def _(i):
        x_cur = x_scr[...] + _SCALE * res_scr[...]            # (T, Lp) f32
        h = _conv_taps(x_cur, [(-1, w1_ref[2 * i]), (1, w1_ref[2 * i + 1])])
        h = _conv_taps(h,     [(-1, w2_ref[2 * i]), (1, w2_ref[2 * i + 1])])
        y = _conv_taps(h,     [(-1, w3_ref[2 * i]), (1, w3_ref[2 * i + 1])])
        y = jnp.maximum(y, 0.0)
        y = y * bs_ref[i] + bh_ref[i]
        x_scr[...] = y
        res_scr[...] = y

    # ---- prefinal dense block: fc1 -> fc2 -> ReLU -> BN affine (f32 epilogue)
    xf = x_scr[...]
    h = jnp.dot(xf.astype(jnp.bfloat16), pw1_ref[...],
                preferred_element_type=jnp.float32) + pb1_ref[...]
    z = jnp.dot(h.astype(jnp.bfloat16), pw2_ref[...],
                preferred_element_type=jnp.float32) + pb2_ref[...]
    z = jnp.maximum(z, 0.0)
    z = z * ps_ref[...] + ph_ref[...]
    o_ref[0] = z.astype(o_ref.dtype)                          # lane-dense store


# ----------------------------------------------------------------------------
# Wrapper
# ----------------------------------------------------------------------------
def tdnnf_forward(kparams, x, *, out_dim):
    """(B, T, 80) -> (B, T, out_dim) with one fused pallas_call, grid over B."""
    B, T, cin = x.shape
    ip, tf, pp = kparams['input'], kparams['tdnnf'], kparams['prefinal']
    num_layers = tf['bn_scale'].shape[0]
    Lp = tf['bn_scale'].shape[-1]
    Op = pp['w2'].shape[-1]

    args = [x, ip['w'], ip['b'], ip['bn_scale'], ip['bn_shift'],
            tf['w1'], tf['w2'], tf['w3'], tf['bn_scale'], tf['bn_shift'],
            pp['w1'], pp['b1'], pp['w2'], pp['b2'], pp['bn_scale'], pp['bn_shift']]

    def resident(a):
        # Full-array, grid-invariant block: weights/affines stay VMEM-resident.
        zeros = (0,) * a.ndim
        return pl.BlockSpec(a.shape, lambda b: zeros)

    in_specs = ([pl.BlockSpec((1, T, cin), lambda b: (b, 0, 0))]
                + [resident(a) for a in args[1:]])

    # TODO(synk): for very long T or large L (production sizes), add a time-tile
    # grid axis with a per-layer halo and stream the stacked layer weights via
    # an "arbitrary" grid axis instead of keeping them all VMEM-resident.
    out = pl.pallas_call(
        functools.partial(_tdnnf_fused_kernel, num_layers=num_layers),
        out_shape=jax.ShapeDtypeStruct((B, T, Op), jnp.float32),
        grid=(B,),
        in_specs=in_specs,
        out_specs=pl.BlockSpec((1, T, Op), lambda b: (b, 0, 0)),
        scratch_shapes=[pltpu.VMEM((T, Lp), jnp.float32),   # x_cur carry
                        pltpu.VMEM((T, Lp), jnp.float32)],  # skip carry
        compiler_params=pltpu.CompilerParams(
            dimension_semantics=("parallel",),
            vmem_limit_bytes=32 * 1024 * 1024),
    )(*args)
    return out[..., :out_dim]


# ----------------------------------------------------------------------------
# Parameters (deterministic synthetic init, shapes match the PyTorch module)
# ----------------------------------------------------------------------------
def _fold_bn(gamma, beta):
    # Fresh BatchNorm1d running stats: mean = 0, var = 1 (eval mode).
    scale = gamma / jnp.sqrt(1.0 + _BN_EPS)
    shift = beta
    return scale, shift


def init_params(key, hp):
    """Canonical f32 parameters (conv weights in (K, C_in, C_out) layout)."""
    in_dim = 80
    L, Bd, Od, NL = hp['large_dim'], hp['bottle_dim'], hp['output_dim'], hp['num_layers']
    keys = iter(jax.random.split(key, 4 + 5 * NL + 6))

    def normal(shape, std):
        return (std * jax.random.normal(next(keys), shape)).astype(jnp.float32)

    params = {}

    # _input_layer: Conv1d(80, L, 5, padding=2) + bias, ReLU, BN(L)
    g = 1.0 + normal((1, L), 0.1)
    b = normal((1, L), 0.1)
    bn_s, bn_h = _fold_bn(g, b)
    params['input'] = dict(
        w=normal((5, in_dim, L), (in_dim * 5) ** -0.5),
        b=normal((1, L), 0.1),
        bn_scale=bn_s, bn_shift=bn_h,
    )

    # FTDNNLayer x NL: three Conv1d(kernel=2, dilation=2, padding=1, bias=False)
    layers = []
    for _ in range(NL):
        w1 = normal((2, L, Bd), (L * 2) ** -0.5)     # factor1: large -> bottle
        w2 = normal((2, Bd, Bd), (Bd * 2) ** -0.5)   # factor2: bottle -> bottle
        w3 = normal((2, Bd, L), (Bd * 2) ** -0.5)    # factor3: bottle -> large
        g = 1.0 + normal((1, L), 0.1)
        b = normal((1, L), 0.1)
        bn_s, bn_h = _fold_bn(g, b)
        layers.append(dict(w1=w1, w2=w2, w3=w3, bn_scale=bn_s, bn_shift=bn_h))
    params['tdnnf'] = layers

    # _prefinal_layer: Linear(L, Bd) -> Linear(Bd, Od) -> ReLU -> BN(Od)
    w1 = normal((L, Bd), L ** -0.5)
    b1 = normal((1, Bd), 0.1)
    w2 = normal((Bd, Od), Bd ** -0.5)
    b2 = normal((1, Od), 0.1)
    g = 1.0 + normal((1, Od), 0.1)
    b = normal((1, Od), 0.1)
    bn_s, bn_h = _fold_bn(g, b)
    params['prefinal'] = dict(w1=w1, b1=b1, w2=w2, b2=b2, bn_scale=bn_s, bn_shift=bn_h)
    return params


def prepare_kernel_params(params):
    """One-time host-side prep for the Pallas kernel:
       * keep conv weights split per tap (no im2col flattening),
       * zero-pad every channel dim (except the raw 80-dim input channels) up
         to a multiple of 128 so all MXU N dims and the output store are
         lane-dense,
       * stack per-layer FTDNN weights along a leading axis so the kernel can
         stream them with a dynamic index inside pl.loop,
       * cast matmul weights to bf16 (biases / folded-BN affines stay f32).
    Padded channels carry zero weights / zero affine, so they stay exactly
    zero through ReLU/BN/skip and do not change the result."""
    def pad_to(a, axis, n):
        pad = [(0, 0)] * a.ndim
        pad[axis] = (0, n - a.shape[axis])
        return jnp.pad(a, pad)

    L = params['input']['w'].shape[2]
    Bd = params['tdnnf'][0]['w1'].shape[2]
    Od = params['prefinal']['w2'].shape[1]
    Lp, Bp, Op = (_round_up(n, _LANE) for n in (L, Bd, Od))

    ip = params['input']
    kp_input = dict(
        w=pad_to(ip['w'], 2, Lp).astype(jnp.bfloat16),        # (5, 80, Lp)
        b=pad_to(ip['b'], 1, Lp),
        bn_scale=pad_to(ip['bn_scale'], 1, Lp),
        bn_shift=pad_to(ip['bn_shift'], 1, Lp))

    w1s, w2s, w3s, bss, bhs = [], [], [], [], []
    for lp in params['tdnnf']:
        w1s.append(pad_to(pad_to(lp['w1'], 1, Lp), 2, Bp))    # (2, Lp, Bp)
        w2s.append(pad_to(pad_to(lp['w2'], 1, Bp), 2, Bp))    # (2, Bp, Bp)
        w3s.append(pad_to(pad_to(lp['w3'], 1, Bp), 2, Lp))    # (2, Bp, Lp)
        bss.append(pad_to(lp['bn_scale'], 1, Lp))
        bhs.append(pad_to(lp['bn_shift'], 1, Lp))
    nl = len(params['tdnnf'])
    kp_tdnnf = dict(
        w1=jnp.stack(w1s).reshape(nl * 2, Lp, Bp).astype(jnp.bfloat16),
        w2=jnp.stack(w2s).reshape(nl * 2, Bp, Bp).astype(jnp.bfloat16),
        w3=jnp.stack(w3s).reshape(nl * 2, Bp, Lp).astype(jnp.bfloat16),
        bn_scale=jnp.stack(bss),                              # (NL, 1, Lp)
        bn_shift=jnp.stack(bhs))

    pp = params['prefinal']
    kp_prefinal = dict(
        w1=pad_to(pad_to(pp['w1'], 0, Lp), 1, Bp).astype(jnp.bfloat16),
        b1=pad_to(pp['b1'], 1, Bp),
        w2=pad_to(pad_to(pp['w2'], 0, Bp), 1, Op).astype(jnp.bfloat16),
        b2=pad_to(pp['b2'], 1, Op),
        bn_scale=pad_to(pp['bn_scale'], 1, Op),
        bn_shift=pad_to(pp['bn_shift'], 1, Op))
    return dict(input=kp_input, tdnnf=kp_tdnnf, prefinal=kp_prefinal)


# ----------------------------------------------------------------------------
# Pure-JAX f32 reference (for correctness check)
# ----------------------------------------------------------------------------
def _ref_conv(x, w, dilation, padding, *, b=None, scale=None, shift=None, relu=False):
    y = jax.lax.conv_general_dilated(
        x, w, window_strides=(1,), padding=[(padding, padding)],
        rhs_dilation=(dilation,), dimension_numbers=('NWC', 'WIO', 'NWC'),
        precision=jax.lax.Precision.HIGHEST)
    if b is not None:
        y = y + b
    if relu:
        y = jnp.maximum(y, 0.0)
    if scale is not None:
        y = y * scale + shift
    return y


def ref_forward(params, x):
    p = params['input']
    x = _ref_conv(x, p['w'], 1, 2, b=p['b'], scale=p['bn_scale'],
                  shift=p['bn_shift'], relu=True)
    res = None
    for i, lp in enumerate(params['tdnnf']):
        if i > 0:
            x = x + _SCALE * res
        h = _ref_conv(x, lp['w1'], 2, 1)
        h = _ref_conv(h, lp['w2'], 2, 1)
        x = _ref_conv(h, lp['w3'], 2, 1, scale=lp['bn_scale'],
                      shift=lp['bn_shift'], relu=True)
        res = x
    pp = params['prefinal']
    h = jnp.einsum('btd,de->bte', x, pp['w1'],
                   precision=jax.lax.Precision.HIGHEST) + pp['b1']
    y = jnp.einsum('btd,de->bte', h, pp['w2'],
                   precision=jax.lax.Precision.HIGHEST) + pp['b2']
    y = jnp.maximum(y, 0.0)
    return y * pp['bn_scale'] + pp['bn_shift']


# ----------------------------------------------------------------------------
if __name__ == "__main__":
    hp = dict(output_dim=32, large_dim=64, bottle_dim=32, num_layers=3)
    B, T, IN_DIM = 2, 16, 80

    key = jax.random.PRNGKey(0)
    pkey, xkey = jax.random.split(key)
    params = init_params(pkey, hp)
    kparams = prepare_kernel_params(params)      # one-time, outside the hot path
    x = jax.random.normal(xkey, (B, T, IN_DIM), jnp.float32)

    fwd = jax.jit(functools.partial(tdnnf_forward, out_dim=hp['output_dim']))
    out = jax.block_until_ready(fwd(kparams, x))

    assert out.shape == (B, T, hp['output_dim']), out.shape
    assert bool(jnp.all(jnp.isfinite(out)))

    ref = ref_forward(params, x)
    rel_err = float(jnp.max(jnp.abs(out - ref)) / (jnp.max(jnp.abs(ref)) + 1e-6))
    # bf16 matmul inputs with f32 accumulation -> expect ~1e-3..1e-2 relative error
    assert rel_err < 5e-2, f"mismatch vs reference, rel_err={rel_err}"

    print("KERNEL_OK")
</pallas_src>

<mosaic_0001>
module attributes {stable_mosaic.version = 11 : i64} {
  func.func @_tdnnf_fused_kernel(%arg0: i32, %arg1: memref<1x16x80xf32, #tpu.memory_space<vmem>>, %arg2: memref<5x80x128xbf16, #tpu.memory_space<vmem>>, %arg3: memref<1x128xf32, #tpu.memory_space<vmem>>, %arg4: memref<1x128xf32, #tpu.memory_space<vmem>>, %arg5: memref<1x128xf32, #tpu.memory_space<vmem>>, %arg6: memref<6x128x128xbf16, #tpu.memory_space<vmem>>, %arg7: memref<6x128x128xbf16, #tpu.memory_space<vmem>>, %arg8: memref<6x128x128xbf16, #tpu.memory_space<vmem>>, %arg9: memref<3x1x128xf32, #tpu.memory_space<vmem>>, %arg10: memref<3x1x128xf32, #tpu.memory_space<vmem>>, %arg11: memref<128x128xbf16, #tpu.memory_space<vmem>>, %arg12: memref<1x128xf32, #tpu.memory_space<vmem>>, %arg13: memref<128x128xbf16, #tpu.memory_space<vmem>>, %arg14: memref<1x128xf32, #tpu.memory_space<vmem>>, %arg15: memref<1x128xf32, #tpu.memory_space<vmem>>, %arg16: memref<1x128xf32, #tpu.memory_space<vmem>>, %arg17: memref<1x16x128xf32, #tpu.memory_space<vmem>>, %arg18: memref<16x128xf32, #tpu.memory_space<vmem>>, %arg19: memref<16x128xf32, #tpu.memory_space<vmem>>) attributes {dimension_semantics = [#tpu.dimension_semantics<parallel>], iteration_bounds = array<i64: 2>, scalar_prefetch = 0 : i64, scratch_operands = 2 : i64, tpu.core_type = #tpu.core_type<tc>, window_params = [{transform_indices = @transform_0, window_bounds = array<i64: 1, 16, 80>}, {pipeline_mode = #tpu.pipeline_mode<synchronous>, transform_indices = @transform_1, window_bounds = array<i64: 5, 80, 128>}, {pipeline_mode = #tpu.pipeline_mode<synchronous>, transform_indices = @transform_2, window_bounds = array<i64: 1, 128>}, {pipeline_mode = #tpu.pipeline_mode<synchronous>, transform_indices = @transform_3, window_bounds = array<i64: 1, 128>}, {pipeline_mode = #tpu.pipeline_mode<synchronous>, transform_indices = @transform_4, window_bounds = array<i64: 1, 128>}, {pipeline_mode = #tpu.pipeline_mode<synchronous>, transform_indices = @transform_5, window_bounds = array<i64: 6, 128, 128>}, {pipeline_mode = #tpu.pipeline_mode<synchronous>, transform_indices = @transform_6, window_bounds = array<i64: 6, 128, 128>}, {pipeline_mode = #tpu.pipeline_mode<synchronous>, transform_indices = @transform_7, window_bounds = array<i64: 6, 128, 128>}, {pipeline_mode = #tpu.pipeline_mode<synchronous>, transform_indices = @transform_8, window_bounds = array<i64: 3, 1, 128>}, {pipeline_mode = #tpu.pipeline_mode<synchronous>, transform_indices = @transform_9, window_bounds = array<i64: 3, 1, 128>}, {pipeline_mode = #tpu.pipeline_mode<synchronous>, transform_indices = @transform_10, window_bounds = array<i64: 128, 128>}, {pipeline_mode = #tpu.pipeline_mode<synchronous>, transform_indices = @transform_11, window_bounds = array<i64: 1, 128>}, {pipeline_mode = #tpu.pipeline_mode<synchronous>, transform_indices = @transform_12, window_bounds = array<i64: 128, 128>}, {pipeline_mode = #tpu.pipeline_mode<synchronous>, transform_indices = @transform_13, window_bounds = array<i64: 1, 128>}, {pipeline_mode = #tpu.pipeline_mode<synchronous>, transform_indices = @transform_14, window_bounds = array<i64: 1, 128>}, {pipeline_mode = #tpu.pipeline_mode<synchronous>, transform_indices = @transform_15, window_bounds = array<i64: 1, 128>}, {transform_indices = @transform_16, window_bounds = array<i64: 1, 16, 128>}]} {
    %c0 = arith.constant 0 : index
    %c0_0 = arith.constant 0 : index
    %c0_1 = arith.constant 0 : index
    %0 = vector.load %arg1[%c0, %c0_0, %c0_1] : memref<1x16x80xf32, #tpu.memory_space<vmem>>, vector<1x16x80xf32>
    %1 = vector.shape_cast %0 : vector<1x16x80xf32> to vector<16x80xf32>
    %c0_2 = arith.constant 0 : index
    %c0_3 = arith.constant 0 : index
    %c0_4 = arith.constant 0 : index
    %2 = vector.load %arg2[%c0_2, %c0_3, %c0_4] : memref<5x80x128xbf16, #tpu.memory_space<vmem>>, vector<1x80x128xbf16>
    %3 = vector.shape_cast %2 : vector<1x80x128xbf16> to vector<80x128xbf16>
    %c1 = arith.constant 1 : index
    %c0_5 = arith.constant 0 : index
    %c0_6 = arith.constant 0 : index
    %4 = vector.load %arg2[%c1, %c0_5, %c0_6] : memref<5x80x128xbf16, #tpu.memory_space<vmem>>, vector<1x80x128xbf16>
    %5 = vector.shape_cast %4 : vector<1x80x128xbf16> to vector<80x128xbf16>
    %c2 = arith.constant 2 : index
    %c0_7 = arith.constant 0 : index
    %c0_8 = arith.constant 0 : index
    %6 = vector.load %arg2[%c2, %c0_7, %c0_8] : memref<5x80x128xbf16, #tpu.memory_space<vmem>>, vector<1x80x128xbf16>
    %7 = vector.shape_cast %6 : vector<1x80x128xbf16> to vector<80x128xbf16>
    %c3 = arith.constant 3 : index
    %c0_9 = arith.constant 0 : index
    %c0_10 = arith.constant 0 : index
    %8 = vector.load %arg2[%c3, %c0_9, %c0_10] : memref<5x80x128xbf16, #tpu.memory_space<vmem>>, vector<1x80x128xbf16>
    %9 = vector.shape_cast %8 : vector<1x80x128xbf16> to vector<80x128xbf16>
    %c4 = arith.constant 4 : index
    %c0_11 = arith.constant 0 : index
    %c0_12 = arith.constant 0 : index
    %10 = vector.load %arg2[%c4, %c0_11, %c0_12] : memref<5x80x128xbf16, #tpu.memory_space<vmem>>, vector<1x80x128xbf16>
    %11 = vector.shape_cast %10 : vector<1x80x128xbf16> to vector<80x128xbf16>
    %cst = arith.constant 0.000000e+00 : f32
    %12 = vector.broadcast %cst : f32 to vector<2x80xf32>
    %13 = vector.extract_strided_slice %1 {offsets = [0, 0], sizes = [14, 80], strides = [1, 1]} : vector<16x80xf32> to vector<14x80xf32>
    %14 = tpu.concatenate %12, %13 in 0 : vector<2x80xf32>, vector<14x80xf32> -> vector<16x80xf32>
    %15 = arith.truncf %14 : vector<16x80xf32> to vector<16x80xbf16>
    %cst_13 = arith.constant dense<0.000000e+00> : vector<16x128xf32>
    %16 = tpu.matmul %15, %3, %cst_13 {dimension_numbers = #tpu.dot_dimension_numbers<[1], [0], [0], [1], [0, 0, 1, 1], [], []>} : vector<16x80xbf16>, vector<80x128xbf16>, vector<16x128xf32> -> vector<16x128xf32>
    %cst_14 = arith.constant 0.000000e+00 : f32
    %17 = vector.broadcast %cst_14 : f32 to vector<1x80xf32>
    %18 = vector.extract_strided_slice %1 {offsets = [0, 0], sizes = [15, 80], strides = [1, 1]} : vector<16x80xf32> to vector<15x80xf32>
    %19 = tpu.concatenate %17, %18 in 0 : vector<1x80xf32>, vector<15x80xf32> -> vector<16x80xf32>
    %20 = arith.truncf %19 : vector<16x80xf32> to vector<16x80xbf16>
    %cst_15 = arith.constant dense<0.000000e+00> : vector<16x128xf32>
    %21 = tpu.matmul %20, %5, %cst_15 {dimension_numbers = #tpu.dot_dimension_numbers<[1], [0], [0], [1], [0, 0, 1, 1], [], []>} : vector<16x80xbf16>, vector<80x128xbf16>, vector<16x128xf32> -> vector<16x128xf32>
    %22 = arith.addf %16, %21 : vector<16x128xf32>
    %23 = arith.truncf %1 : vector<16x80xf32> to vector<16x80xbf16>
    %cst_16 = arith.constant dense<0.000000e+00> : vector<16x128xf32>
    %24 = tpu.matmul %23, %7, %cst_16 {dimension_numbers = #tpu.dot_dimension_numbers<[1], [0], [0], [1], [0, 0, 1, 1], [], []>} : vector<16x80xbf16>, vector<80x128xbf16>, vector<16x128xf32> -> vector<16x128xf32>
    %25 = arith.addf %22, %24 : vector<16x128xf32>
    %cst_17 = arith.constant 0.000000e+00 : f32
    %26 = vector.broadcast %cst_17 : f32 to vector<1x80xf32>
    %27 = vector.extract_strided_slice %1 {offsets = [1, 0], sizes = [15, 80], strides = [1, 1]} : vector<16x80xf32> to vector<15x80xf32>
    %28 = tpu.concatenate %27, %26 in 0 : vector<15x80xf32>, vector<1x80xf32> -> vector<16x80xf32>
    %29 = arith.truncf %28 : vector<16x80xf32> to vector<16x80xbf16>
    %cst_18 = arith.constant dense<0.000000e+00> : vector<16x128xf32>
    %30 = tpu.matmul %29, %9, %cst_18 {dimension_numbers = #tpu.dot_dimension_numbers<[1], [0], [0], [1], [0, 0, 1, 1], [], []>} : vector<16x80xbf16>, vector<80x128xbf16>, vector<16x128xf32> -> vector<16x128xf32>
    %31 = arith.addf %25, %30 : vector<16x128xf32>
    %cst_19 = arith.constant 0.000000e+00 : f32
    %32 = vector.broadcast %cst_19 : f32 to vector<2x80xf32>
    %33 = vector.extract_strided_slice %1 {offsets = [2, 0], sizes = [14, 80], strides = [1, 1]} : vector<16x80xf32> to vector<14x80xf32>
    %34 = tpu.concatenate %33, %32 in 0 : vector<14x80xf32>, vector<2x80xf32> -> vector<16x80xf32>
    %35 = arith.truncf %34 : vector<16x80xf32> to vector<16x80xbf16>
    %cst_20 = arith.constant dense<0.000000e+00> : vector<16x128xf32>
    %36 = tpu.matmul %35, %11, %cst_20 {dimension_numbers = #tpu.dot_dimension_numbers<[1], [0], [0], [1], [0, 0, 1, 1], [], []>} : vector<16x80xbf16>, vector<80x128xbf16>, vector<16x128xf32> -> vector<16x128xf32>
    %37 = arith.addf %31, %36 : vector<16x128xf32>
    %c0_21 = arith.constant 0 : index
    %c0_22 = arith.constant 0 : index
    %38 = vector.load %arg3[%c0_21, %c0_22] : memref<1x128xf32, #tpu.memory_space<vmem>>, vector<1x128xf32>
    %39 = vector.broadcast %38 : vector<1x128xf32> to vector<16x128xf32>
    %40 = arith.addf %37, %39 : vector<16x128xf32>
    %cst_23 = arith.constant 0.000000e+00 : f32
    %41 = vector.broadcast %cst_23 : f32 to vector<16x128xf32>
    %42 = arith.maximumf %40, %41 : vector<16x128xf32>
    %c0_24 = arith.constant 0 : index
    %c0_25 = arith.constant 0 : index
    %43 = vector.load %arg4[%c0_24, %c0_25] : memref<1x128xf32, #tpu.memory_space<vmem>>, vector<1x128xf32>
    %44 = vector.broadcast %43 : vector<1x128xf32> to vector<16x128xf32>
    %45 = arith.mulf %42, %44 : vector<16x128xf32>
    %c0_26 = arith.constant 0 : index
    %c0_27 = arith.constant 0 : index
    %46 = vector.load %arg5[%c0_26, %c0_27] : memref<1x128xf32, #tpu.memory_space<vmem>>, vector<1x128xf32>
    %47 = vector.broadcast %46 : vector<1x128xf32> to vector<16x128xf32>
    %48 = arith.addf %45, %47 : vector<16x128xf32>
    %c0_28 = arith.constant 0 : index
    %c0_29 = arith.constant 0 : index
    %49 = vector.load %arg18[%c0_28, %c0_29] : memref<16x128xf32, #tpu.memory_space<vmem>>, vector<16x128xf32>
    tpu.vector_store %arg18[%c0_28, %c0_29], %48 {strides = array<i32>} : memref<16x128xf32, #tpu.memory_space<vmem>>, vector<16x128xf32>,
    %cst_30 = arith.constant 0.000000e+00 : f32
    %50 = vector.broadcast %cst_30 : f32 to vector<16x128xf32>
    %c0_31 = arith.constant 0 : index
    %c0_32 = arith.constant 0 : index
    %51 = vector.load %arg19[%c0_31, %c0_32] : memref<16x128xf32, #tpu.memory_space<vmem>>, vector<16x128xf32>
    tpu.vector_store %arg19[%c0_31, %c0_32], %50 {strides = array<i32>} : memref<16x128xf32, #tpu.memory_space<vmem>>, vector<16x128xf32>,
    %c0_i32 = arith.constant 0 : i32
    %c3_i32 = arith.constant 3 : i32
    %52 = arith.addi %c0_i32, %c3_i32 : i32
    %c1_i32 = arith.constant 1 : i32
    scf.for %arg20 = %c0_i32 to %52 step %c1_i32  : i32 {
      %c1_i32_54 = arith.constant 1 : i32
      %77 = arith.muli %arg20, %c1_i32_54 : i32
      %c0_i32_55 = arith.constant 0 : i32
      %78 = arith.addi %c0_i32_55, %77 : i32
      %c0_56 = arith.constant 0 : index
      %c0_57 = arith.constant 0 : index
      %79 = vector.load %arg18[%c0_56, %c0_57] : memref<16x128xf32, #tpu.memory_space<vmem>>, vector<16x128xf32>
      %c0_58 = arith.constant 0 : index
      %c0_59 = arith.constant 0 : index
      %80 = vector.load %arg19[%c0_58, %c0_59] : memref<16x128xf32, #tpu.memory_space<vmem>>, vector<16x128xf32>
      %cst_60 = arith.constant 6.600000e-01 : f32
      %81 = vector.broadcast %cst_60 : f32 to vector<16x128xf32>
      %82 = arith.mulf %81, %80 : vector<16x128xf32>
      %83 = arith.addf %79, %82 : vector<16x128xf32>
      %c2_i32 = arith.constant 2 : i32
      %84 = arith.muli %c2_i32, %78 : i32
      %85 = arith.index_cast %84 : i32 to index
      %c0_61 = arith.constant 0 : index
      %c0_62 = arith.constant 0 : index
      %86 = vector.load %arg6[%85, %c0_61, %c0_62] : memref<6x128x128xbf16, #tpu.memory_space<vmem>>, vector<1x128x128xbf16>
      %87 = vector.shape_cast %86 : vector<1x128x128xbf16> to vector<128x128xbf16>
      %c2_i32_63 = arith.constant 2 : i32
      %88 = arith.muli %c2_i32_63, %78 : i32
      %c1_i32_64 = arith.constant 1 : i32
      %89 = arith.addi %88, %c1_i32_64 : i32
      %90 = arith.index_cast %89 : i32 to index
      %c0_65 = arith.constant 0 : index
      %c0_66 = arith.constant 0 : index
      %91 = vector.load %arg6[%90, %c0_65, %c0_66] : memref<6x128x128xbf16, #tpu.memory_space<vmem>>, vector<1x128x128xbf16>
      %92 = vector.shape_cast %91 : vector<1x128x128xbf16> to vector<128x128xbf16>
      %cst_67 = arith.constant 0.000000e+00 : f32
      %93 = vector.broadcast %cst_67 : f32 to vector<1x128xf32>
      %94 = vector.extract_strided_slice %83 {offsets = [0, 0], sizes = [15, 128], strides = [1, 1]} : vector<16x128xf32> to vector<15x128xf32>
      %95 = tpu.concatenate %93, %94 in 0 : vector<1x128xf32>, vector<15x128xf32> -> vector<16x128xf32>
      %96 = arith.truncf %95 : vector<16x128xf32> to vector<16x128xbf16>
      %cst_68 = arith.constant dense<0.000000e+00> : vector<16x128xf32>
      %97 = tpu.matmul %96, %87, %cst_68 {dimension_numbers = #tpu.dot_dimension_numbers<[1], [0], [0], [1], [0, 0, 1, 1], [], []>} : vector<16x128xbf16>, vector<128x128xbf16>, vector<16x128xf32> -> vector<16x128xf32>
      %cst_69 = arith.constant 0.000000e+00 : f32
      %98 = vector.broadcast %cst_69 : f32 to vector<1x128xf32>
      %99 = vector.extract_strided_slice %83 {offsets = [1, 0], sizes = [15, 128], strides = [1, 1]} : vector<16x128xf32> to vector<15x128xf32>
      %100 = tpu.concatenate %99, %98 in 0 : vector<15x128xf32>, vector<1x128xf32> -> vector<16x128xf32>
      %101 = arith.truncf %100 : vector<16x128xf32> to vector<16x128xbf16>
      %cst_70 = arith.constant dense<0.000000e+00> : vector<16x128xf32>
      %102 = tpu.matmul %101, %92, %cst_70 {dimension_numbers = #tpu.dot_dimension_numbers<[1], [0], [0], [1], [0, 0, 1, 1], [], []>} : vector<16x128xbf16>, vector<128x128xbf16>, vector<16x128xf32> -> vector<16x128xf32>
      %103 = arith.addf %97, %102 : vector<16x128xf32>
      %c2_i32_71 = arith.constant 2 : i32
      %104 = arith.muli %c2_i32_71, %78 : i32
      %105 = arith.index_cast %104 : i32 to index
      %c0_72 = arith.constant 0 : index
      %c0_73 = arith.constant 0 : index
      %106 = vector.load %arg7[%105, %c0_72, %c0_73] : memref<6x128x128xbf16, #tpu.memory_space<vmem>>, vector<1x128x128xbf16>
      %107 = vector.shape_cast %106 : vector<1x128x128xbf16> to vector<128x128xbf16>
      %c2_i32_74 = arith.constant 2 : i32
      %108 = arith.muli %c2_i32_74, %78 : i32
      %c1_i32_75 = arith.constant 1 : i32
      %109 = arith.addi %108, %c1_i32_75 : i32
      %110 = arith.index_cast %109 : i32 to index
      %c0_76 = arith.constant 0 : index
      %c0_77 = arith.constant 0 : index
      %111 = vector.load %arg7[%110, %c0_76, %c0_77] : memref<6x128x128xbf16, #tpu.memory_space<vmem>>, vector<1x128x128xbf16>
      %112 = vector.shape_cast %111 : vector<1x128x128xbf16> to vector<128x128xbf16>
      %cst_78 = arith.constant 0.000000e+00 : f32
      %113 = vector.broadcast %cst_78 : f32 to vector<1x128xf32>
      %114 = vector.extract_strided_slice %103 {offsets = [0, 0], sizes = [15, 128], strides = [1, 1]} : vector<16x128xf32> to vector<15x128xf32>
      %115 = tpu.concatenate %113, %114 in 0 : vector<1x128xf32>, vector<15x128xf32> -> vector<16x128xf32>
      %116 = arith.truncf %115 : vector<16x128xf32> to vector<16x128xbf16>
      %cst_79 = arith.constant dense<0.000000e+00> : vector<16x128xf32>
      %117 = tpu.matmul %116, %107, %cst_79 {dimension_numbers = #tpu.dot_dimension_numbers<[1], [0], [0], [1], [0, 0, 1, 1], [], []>} : vector<16x128xbf16>, vector<128x128xbf16>, vector<16x128xf32> -> vector<16x128xf32>
      %cst_80 = arith.constant 0.000000e+00 : f32
      %118 = vector.broadcast %cst_80 : f32 to vector<1x128xf32>
      %119 = vector.extract_strided_slice %103 {offsets = [1, 0], sizes = [15, 128], strides = [1, 1]} : vector<16x128xf32> to vector<15x128xf32>
      %120 = tpu.concatenate %119, %118 in 0 : vector<15x128xf32>, vector<1x128xf32> -> vector<16x128xf32>
      %121 = arith.truncf %120 : vector<16x128xf32> to vector<16x128xbf16>
      %cst_81 = arith.constant dense<0.000000e+00> : vector<16x128xf32>
      %122 = tpu.matmul %121, %112, %cst_81 {dimension_numbers = #tpu.dot_dimension_numbers<[1], [0], [0], [1], [0, 0, 1, 1], [], []>} : vector<16x128xbf16>, vector<128x128xbf16>, vector<16x128xf32> -> vector<16x128xf32>
      %123 = arith.addf %117, %122 : vector<16x128xf32>
      %c2_i32_82 = arith.constant 2 : i32
      %124 = arith.muli %c2_i32_82, %78 : i32
      %125 = arith.index_cast %124 : i32 to index
      %c0_83 = arith.constant 0 : index
      %c0_84 = arith.constant 0 : index
      %126 = vector.load %arg8[%125, %c0_83, %c0_84] : memref<6x128x128xbf16, #tpu.memory_space<vmem>>, vector<1x128x128xbf16>
      %127 = vector.shape_cast %126 : vector<1x128x128xbf16> to vector<128x128xbf16>
      %c2_i32_85 = arith.constant 2 : i32
      %128 = arith.muli %c2_i32_85, %78 : i32
      %c1_i32_86 = arith.constant 1 : i32
      %129 = arith.addi %128, %c1_i32_86 : i32
      %130 = arith.index_cast %129 : i32 to index
      %c0_87 = arith.constant 0 : index
      %c0_88 = arith.constant 0 : index
      %131 = vector.load %arg8[%130, %c0_87, %c0_88] : memref<6x128x128xbf16, #tpu.memory_space<vmem>>, vector<1x128x128xbf16>
      %132 = vector.shape_cast %131 : vector<1x128x128xbf16> to vector<128x128xbf16>
      %cst_89 = arith.constant 0.000000e+00 : f32
      %133 = vector.broadcast %cst_89 : f32 to vector<1x128xf32>
      %134 = vector.extract_strided_slice %123 {offsets = [0, 0], sizes = [15, 128], strides = [1, 1]} : vector<16x128xf32> to vector<15x128xf32>
      %135 = tpu.concatenate %133, %134 in 0 : vector<1x128xf32>, vector<15x128xf32> -> vector<16x128xf32>
      %136 = arith.truncf %135 : vector<16x128xf32> to vector<16x128xbf16>
      %cst_90 = arith.constant dense<0.000000e+00> : vector<16x128xf32>
      %137 = tpu.matmul %136, %127, %cst_90 {dimension_numbers = #tpu.dot_dimension_numbers<[1], [0], [0], [1], [0, 0, 1, 1], [], []>} : vector<16x128xbf16>, vector<128x128xbf16>, vector<16x128xf32> -> vector<16x128xf32>
      %cst_91 = arith.constant 0.000000e+00 : f32
      %138 = vector.broadcast %cst_91 : f32 to vector<1x128xf32>
      %139 = vector.extract_strided_slice %123 {offsets = [1, 0], sizes = [15, 128], strides = [1, 1]} : vector<16x128xf32> to vector<15x128xf32>
      %140 = tpu.concatenate %139, %138 in 0 : vector<15x128xf32>, vector<1x128xf32> -> vector<16x128xf32>
      %141 = arith.truncf %140 : vector<16x128xf32> to vector<16x128xbf16>
      %cst_92 = arith.constant dense<0.000000e+00> : vector<16x128xf32>
      %142 = tpu.matmul %141, %132, %cst_92 {dimension_numbers = #tpu.dot_dimension_numbers<[1], [0], [0], [1], [0, 0, 1, 1], [], []>} : vector<16x128xbf16>, vector<128x128xbf16>, vector<16x128xf32> -> vector<16x128xf32>
      %143 = arith.addf %137, %142 : vector<16x128xf32>
      %cst_93 = arith.constant 0.000000e+00 : f32
      %144 = vector.broadcast %cst_93 : f32 to vector<16x128xf32>
      %145 = arith.maximumf %143, %144 : vector<16x128xf32>
      %146 = arith.index_cast %78 : i32 to index
      %c0_94 = arith.constant 0 : index
      %c0_95 = arith.constant 0 : index
      %147 = vector.load %arg9[%146, %c0_94, %c0_95] : memref<3x1x128xf32, #tpu.memory_space<vmem>>, vector<1x1x128xf32>
      %148 = vector.shape_cast %147 : vector<1x1x128xf32> to vector<1x128xf32>
      %149 = vector.broadcast %148 : vector<1x128xf32> to vector<16x128xf32>
      %150 = arith.mulf %145, %149 : vector<16x128xf32>
      %151 = arith.index_cast %78 : i32 to index
      %c0_96 = arith.constant 0 : index
      %c0_97 = arith.constant 0 : index
      %152 = vector.load %arg10[%151, %c0_96, %c0_97] : memref<3x1x128xf32, #tpu.memory_space<vmem>>, vector<1x1x128xf32>
      %153 = vector.shape_cast %152 : vector<1x1x128xf32> to vector<1x128xf32>
      %154 = vector.broadcast %153 : vector<1x128xf32> to vector<16x128xf32>
      %155 = arith.addf %150, %154 : vector<16x128xf32>
      %c0_98 = arith.constant 0 : index
      %c0_99 = arith.constant 0 : index
      %156 = vector.load %arg18[%c0_98, %c0_99] : memref<16x128xf32, #tpu.memory_space<vmem>>, vector<16x128xf32>
      tpu.vector_store %arg18[%c0_98, %c0_99], %155 {strides = array<i32>} : memref<16x128xf32, #tpu.memory_space<vmem>>, vector<16x128xf32>,
      %c0_100 = arith.constant 0 : index
      %c0_101 = arith.constant 0 : index
      %157 = vector.load %arg19[%c0_100, %c0_101] : memref<16x128xf32, #tpu.memory_space<vmem>>, vector<16x128xf32>
      tpu.vector_store %arg19[%c0_100, %c0_101], %155 {strides = array<i32>} : memref<16x128xf32, #tpu.memory_space<vmem>>, vector<16x128xf32>,
    }
    %c3_i32_33 = arith.constant 3 : i32
    %c0_34 = arith.constant 0 : index
    %c0_35 = arith.constant 0 : index
    %53 = vector.load %arg18[%c0_34, %c0_35] : memref<16x128xf32, #tpu.memory_space<vmem>>, vector<16x128xf32>
    %54 = arith.truncf %53 : vector<16x128xf32> to vector<16x128xbf16>
    %c0_36 = arith.constant 0 : index
    %c0_37 = arith.constant 0 : index
    %55 = vector.load %arg11[%c0_36, %c0_37] : memref<128x128xbf16, #tpu.memory_space<vmem>>, vector<128x128xbf16>
    %cst_38 = arith.constant dense<0.000000e+00> : vector<16x128xf32>
    %56 = tpu.matmul %54, %55, %cst_38 {dimension_numbers = #tpu.dot_dimension_numbers<[1], [0], [0], [1], [0, 0, 1, 1], [], []>} : vector<16x128xbf16>, vector<128x128xbf16>, vector<16x128xf32> -> vector<16x128xf32>
    %c0_39 = arith.constant 0 : index
    %c0_40 = arith.constant 0 : index
    %57 = vector.load %arg12[%c0_39, %c0_40] : memref<1x128xf32, #tpu.memory_space<vmem>>, vector<1x128xf32>
    %58 = vector.broadcast %57 : vector<1x128xf32> to vector<16x128xf32>
    %59 = arith.addf %56, %58 : vector<16x128xf32>
    %60 = arith.truncf %59 : vector<16x128xf32> to vector<16x128xbf16>
    %c0_41 = arith.constant 0 : index
    %c0_42 = arith.constant 0 : index
    %61 = vector.load %arg13[%c0_41, %c0_42] : memref<128x128xbf16, #tpu.memory_space<vmem>>, vector<128x128xbf16>
    %cst_43 = arith.constant dense<0.000000e+00> : vector<16x128xf32>
    %62 = tpu.matmul %60, %61, %cst_43 {dimension_numbers = #tpu.dot_dimension_numbers<[1], [0], [0], [1], [0, 0, 1, 1], [], []>} : vector<16x128xbf16>, vector<128x128xbf16>, vector<16x128xf32> -> vector<16x128xf32>
    %c0_44 = arith.constant 0 : index
    %c0_45 = arith.constant 0 : index
    %63 = vector.load %arg14[%c0_44, %c0_45] : memref<1x128xf32, #tpu.memory_space<vmem>>, vector<1x128xf32>
    %64 = vector.broadcast %63 : vector<1x128xf32> to vector<16x128xf32>
    %65 = arith.addf %62, %64 : vector<16x128xf32>
    %cst_46 = arith.constant 0.000000e+00 : f32
    %66 = vector.broadcast %cst_46 : f32 to vector<16x128xf32>
    %67 = arith.maximumf %65, %66 : vector<16x128xf32>
    %c0_47 = arith.constant 0 : index
    %c0_48 = arith.constant 0 : index
    %68 = vector.load %arg15[%c0_47, %c0_48] : memref<1x128xf32, #tpu.memory_space<vmem>>, vector<1x128xf32>
    %69 = vector.broadcast %68 : vector<1x128xf32> to vector<16x128xf32>
    %70 = arith.mulf %67, %69 : vector<16x128xf32>
    %c0_49 = arith.constant 0 : index
    %c0_50 = arith.constant 0 : index
    %71 = vector.load %arg16[%c0_49, %c0_50] : memref<1x128xf32, #tpu.memory_space<vmem>>, vector<1x128xf32>
    %72 = vector.broadcast %71 : vector<1x128xf32> to vector<16x128xf32>
    %73 = arith.addf %70, %72 : vector<16x128xf32>
    %c0_51 = arith.constant 0 : index
    %c0_52 = arith.constant 0 : index
    %c0_53 = arith.constant 0 : index
    %74 = vector.load %arg17[%c0_51, %c0_52, %c0_53] : memref<1x16x128xf32, #tpu.memory_space<vmem>>, vector<1x16x128xf32>
    %75 = vector.shape_cast %74 : vector<1x16x128xf32> to vector<16x128xf32>
    %76 = vector.shape_cast %73 : vector<16x128xf32> to vector<1x16x128xf32>
    tpu.vector_store %arg17[%c0_51, %c0_52, %c0_53], %76 {strides = array<i32>} : memref<1x16x128xf32, #tpu.memory_space<vmem>>, vector<1x16x128xf32>,
    return
  }
  func.func @transform_0(%arg0: i32) -> (i32, i32, i32) {
    %c0_i32 = arith.constant 0 : i32
    %c0_i32_0 = arith.constant 0 : i32
    %c0_i32_1 = arith.constant 0 : i32
    return %arg0, %c0_i32, %c0_i32_0 : i32, i32, i32
  }
  func.func @transform_1(%arg0: i32) -> (i32, i32, i32) {
    %c0_i32 = arith.constant 0 : i32
    %c0_i32_0 = arith.constant 0 : i32
    %c0_i32_1 = arith.constant 0 : i32
    %c0_i32_2 = arith.constant 0 : i32
    return %c0_i32, %c0_i32_0, %c0_i32_1 : i32, i32, i32
  }
  func.func @transform_2(%arg0: i32) -> (i32, i32) {
    %c0_i32 = arith.constant 0 : i32
    %c0_i32_0 = arith.constant 0 : i32
    %c0_i32_1 = arith.constant 0 : i32
    return %c0_i32, %c0_i32_0 : i32, i32
  }
  func.func @transform_3(%arg0: i32) -> (i32, i32) {
    %c0_i32 = arith.constant 0 : i32
    %c0_i32_0 = arith.constant 0 : i32
    %c0_i32_1 = arith.constant 0 : i32
    return %c0_i32, %c0_i32_0 : i32, i32
  }
  func.func @transform_4(%arg0: i32) -> (i32, i32) {
    %c0_i32 = arith.constant 0 : i32
    %c0_i32_0 = arith.constant 0 : i32
    %c0_i32_1 = arith.constant 0 : i32
    return %c0_i32, %c0_i32_0 : i32, i32
  }
  func.func @transform_5(%arg0: i32) -> (i32, i32, i32) {
    %c0_i32 = arith.constant 0 : i32
    %c0_i32_0 = arith.constant 0 : i32
    %c0_i32_1 = arith.constant 0 : i32
    %c0_i32_2 = arith.constant 0 : i32
    return %c0_i32, %c0_i32_0, %c0_i32_1 : i32, i32, i32
  }
  func.func @transform_6(%arg0: i32) -> (i32, i32, i32) {
    %c0_i32 = arith.constant 0 : i32
    %c0_i32_0 = arith.constant 0 : i32
    %c0_i32_1 = arith.constant 0 : i32
    %c0_i32_2 = arith.constant 0 : i32
    return %c0_i32, %c0_i32_0, %c0_i32_1 : i32, i32, i32
  }
  func.func @transform_7(%arg0: i32) -> (i32, i32, i32) {
    %c0_i32 = arith.constant 0 : i32
    %c0_i32_0 = arith.constant 0 : i32
    %c0_i32_1 = arith.constant 0 : i32
    %c0_i32_2 = arith.constant 0 : i32
    return %c0_i32, %c0_i32_0, %c0_i32_1 : i32, i32, i32
  }
  func.func @transform_8(%arg0: i32) -> (i32, i32, i32) {
    %c0_i32 = arith.constant 0 : i32
    %c0_i32_0 = arith.constant 0 : i32
    %c0_i32_1 = arith.constant 0 : i32
    %c0_i32_2 = arith.constant 0 : i32
    return %c0_i32, %c0_i32_0, %c0_i32_1 : i32, i32, i32
  }
  func.func @transform_9(%arg0: i32) -> (i32, i32, i32) {
    %c0_i32 = arith.constant 0 : i32
    %c0_i32_0 = arith.constant 0 : i32
    %c0_i32_1 = arith.constant 0 : i32
    %c0_i32_2 = arith.constant 0 : i32
    return %c0_i32, %c0_i32_0, %c0_i32_1 : i32, i32, i32
  }
  func.func @transform_10(%arg0: i32) -> (i32, i32) {
    %c0_i32 = arith.constant 0 : i32
    %c0_i32_0 = arith.constant 0 : i32
    %c0_i32_1 = arith.constant 0 : i32
    return %c0_i32, %c0_i32_0 : i32, i32
  }
  func.func @transform_11(%arg0: i32) -> (i32, i32) {
    %c0_i32 = arith.constant 0 : i32
    %c0_i32_0 = arith.constant 0 : i32
    %c0_i32_1 = arith.constant 0 : i32
    return %c0_i32, %c0_i32_0 : i32, i32
  }
  func.func @transform_12(%arg0: i32) -> (i32, i32) {
    %c0_i32 = arith.constant 0 : i32
    %c0_i32_0 = arith.constant 0 : i32
    %c0_i32_1 = arith.constant 0 : i32
    return %c0_i32, %c0_i32_0 : i32, i32
  }
  func.func @transform_13(%arg0: i32) -> (i32, i32) {
    %c0_i32 = arith.constant 0 : i32
    %c0_i32_0 = arith.constant 0 : i32
    %c0_i32_1 = arith.constant 0 : i32
    return %c0_i32, %c0_i32_0 : i32, i32
  }
  func.func @transform_14(%arg0: i32) -> (i32, i32) {
    %c0_i32 = arith.constant 0 : i32
    %c0_i32_0 = arith.constant 0 : i32
    %c0_i32_1 = arith.constant 0 : i32
    return %c0_i32, %c0_i32_0 : i32, i32
  }
  func.func @transform_15(%arg0: i32) -> (i32, i32) {
    %c0_i32 = arith.constant 0 : i32
    %c0_i32_0 = arith.constant 0 : i32
    %c0_i32_1 = arith.constant 0 : i32
    return %c0_i32, %c0_i32_0 : i32, i32
  }
  func.func @transform_16(%arg0: i32) -> (i32, i32, i32) {
    %c0_i32 = arith.constant 0 : i32
    %c0_i32_0 = arith.constant 0 : i32
    %c0_i32_1 = arith.constant 0 : i32
    return %arg0, %c0_i32, %c0_i32_0 : i32, i32, i32
  }
}

</mosaic_0001>

<llo_original>
// kernel: tdnnf_forward.1
$region0: #{tdnnf_forward.1}
  #allocation0 [shape = 'u32[]', space=smem, size = 0x4, offset = 0x4, fixed_abs, tag = 'smem constant byte address 0x4 - core index']
  #allocation1 [shape = 'u32[144,128]{1,0:T(1,128)}', space=vmem, size = 0x12000, scoped, tag = 'internal scratch']
  #allocation2 [shape = 'f32[16,128]{1,0:T(8,128)}', space=vmem, size = 0x2000, scoped, tag = 'scratch operand']
  #allocation3 [shape = 'f32[16,128]{1,0:T(8,128)}', space=vmem, size = 0x2000, scoped, tag = 'scratch operand']
  %s0 = inlined_call_operand.hbm [shape: f32[2,16,80], index: 0, kind: input, shape index: {}]
  %s1 = inlined_call_operand.hbm [shape: bf16[5,80,128], index: 1, kind: input, shape index: {}]
  %s2 = inlined_call_operand.hbm [shape: f32[1,128], index: 2, kind: input, shape index: {}]
  %s3 = inlined_call_operand.vmem [shape: f32[1,128], index: 3, kind: input, shape index: {}]
  %s4 = inlined_call_operand.hbm [shape: f32[1,128], index: 4, kind: input, shape index: {}]
  %s5 = inlined_call_operand.hbm [shape: bf16[6,128,128], index: 5, kind: input, shape index: {}]
  %s6 = inlined_call_operand.hbm [shape: bf16[6,128,128], index: 6, kind: input, shape index: {}]
  %s7 = inlined_call_operand.hbm [shape: bf16[6,128,128], index: 7, kind: input, shape index: {}]
  %s8 = inlined_call_operand.vmem [shape: f32[3,1,128], index: 8, kind: input, shape index: {}]
  %s9 = inlined_call_operand.vmem [shape: f32[3,1,128], index: 9, kind: input, shape index: {}]
  %s10 = inlined_call_operand.hbm [shape: bf16[128,128], index: 10, kind: input, shape index: {}]
  %s11 = inlined_call_operand.hbm [shape: f32[1,128], index: 11, kind: input, shape index: {}]
  %s12 = inlined_call_operand.hbm [shape: bf16[128,128], index: 12, kind: input, shape index: {}]
  %s13 = inlined_call_operand.vmem [shape: f32[1,128], index: 13, kind: input, shape index: {}]
  %s14 = inlined_call_operand.vmem [shape: f32[1,128], index: 14, kind: input, shape index: {}]
  %s15 = inlined_call_operand.vmem [shape: f32[1,128], index: 15, kind: input, shape index: {}]
  %s16 = inlined_call_operand.hbm [shape: f32[2,16,128], index: 16, kind: output, shape index: {}]
  %s17 = sld [smem:[#allocation0]]
  $region144: #{tdnnf_forward.1} parent=0
    _
  %s19 = ssub.s32 1, %s17
  %s20 = scalar_select 0, %s19, %s17
  $region1: #{tdnnf_forward.1} parent=0
    #allocation4 [shape = 'u8[16384]{0}', space=vmem, size = 0x4000, scoped, tag = 'input window, operand 0']
    #allocation5 [shape = 's32[2]{0}', space=sflag, size = 0x8, scoped, tag = 'scoped memory for tdnnf_forward.1']
    #allocation6 [shape = 's32[2]{0}', space=sflag, size = 0x8, scoped, tag = 'scoped memory for tdnnf_forward.1']
    #allocation7 [shape = 'u8[102400]{0}', space=vmem, size = 0x19000, scoped, tag = 'input window, operand 1, single buffered']
    #allocation8 [shape = 's32[1]{0}', space=sflag, size = 0x4, scoped, tag = 'scoped memory for tdnnf_forward.1']
    #allocation9 [shape = 'u8[512]{0}', space=vmem, size = 0x400, scoped, tag = 'input window, operand 2, single buffered']
    #allocation10 [shape = 'u8[512]{0}', space=vmem, size = 0x400, scoped, tag = 'input window, operand 4, single buffered']
    #allocation11 [shape = 's32[1]{0}', space=sflag, size = 0x4, scoped, tag = 'scoped memory for tdnnf_forward.1']
    #allocation12 [shape = 'u8[196608]{0}', space=vmem, size = 0x30000, scoped, tag = 'input window, operand 5, single buffered']
    #allocation13 [shape = 'u8[196608]{0}', space=vmem, size = 0x30000, scoped, tag = 'input window, operand 6, single buffered']
    #allocation14 [shape = 's32[1]{0}', space=sflag, size = 0x4, scoped, tag = 'scoped memory for tdnnf_forward.1']
    #allocation15 [shape = 'u8[196608]{0}', space=vmem, size = 0x30000, scoped, tag = 'input window, operand 7, single buffered']
    #allocation16 [shape = 'u8[32768]{0}', space=vmem, size = 0x8000, scoped, tag = 'input window, operand 10, single buffered']
    #allocation17 [shape = 's32[1]{0}', space=sflag, size = 0x4, scoped, tag = 'scoped memory for tdnnf_forward.1']
    #allocation18 [shape = 'u8[512]{0}', space=vmem, size = 0x400, scoped, tag = 'input window, operand 11, single buffered']
    #allocation19 [shape = 'u8[32768]{0}', space=vmem, size = 0x8000, scoped, tag = 'input window, operand 12, single buffered']
    #allocation20 [shape = 's32[1]{0}', space=sflag, size = 0x4, scoped, tag = 'scoped memory for tdnnf_forward.1']
    #allocation21 [shape = 'u8[16384]{0}', space=vmem, size = 0x4000, scoped, tag = 'output window, operand 0']
    %21 = vsyncpa [#allocation5], 0
    %s22 = scalar_lea.sflag [#allocation5], 1
    %23 = vsyncpa %s22, 0
    %24 = vsyncpa [#allocation8], 0
    %25 = vsyncpa [#allocation11], 0
    %26 = vsyncpa [#allocation14], 0
    %27 = vsyncpa [#allocation17], 0
    %28 = vsyncpa [#allocation20], 0
    %29 = vsyncpa [#allocation6], 0
    %s30 = scalar_lea.sflag [#allocation6], 1
    %31 = vsyncpa %s30, 0
    loop: start=0, step=1, limit=4
    $region2: #{tdnnf_forward.1} parent=1 // loop_pre_header
      _
    $region3: #{tdnnf_forward.1} parent=1 // loop_header
      %s33 = sphi 0, %s37
      %p34 = scmp.ge.s32.totalorder %s33, 4
      %s43 = sphi 0, %s45
      %s46 = sphi 0, %s43
      %s47 = sphi 0, %s46
      %s63 = sphi 0, %s47
      %s67 = sphi 0, %s67
      %s69 = sphi 0, %s67
      %s70 = sphi 0, %s69
      %s84 = sphi 0, %s70
      %s88 = sphi 0, %s88
      %s90 = sphi 0, %s88
      %s91 = sphi 0, %s90
      %s105 = sphi 0, %s91
      %s109 = sphi 0, %s109
      %s111 = sphi 0, %s109
      %s112 = sphi 0, %s111
      %s126 = sphi 0, %s112
      %s130 = sphi 0, %s130
      %s132 = sphi 0, %s130
      %s133 = sphi 0, %s132
      %s147 = sphi 0, %s133
      %s151 = sphi 0, %s151
      %s153 = sphi 0, %s151
      %s154 = sphi 0, %s153
      %s168 = sphi 0, %s154
      %s172 = sphi 0, %s172
      %s174 = sphi 0, %s172
      %s175 = sphi 0, %s174
      %s189 = sphi 0, %s175
      %s193 = sphi 0, %s193
      %s195 = sphi 0, %s193
      %s196 = sphi 0, %s195
      %s210 = sphi 0, %s196
      %s214 = sphi 0, %s214
      %s216 = sphi 0, %s214
      %s217 = sphi 0, %s216
      %s231 = sphi 0, %s217
      %s235 = sphi 0, %s235
      %s237 = sphi 0, %s235
      %s238 = sphi 0, %s237
      %s252 = sphi 0, %s238
      %s256 = sphi 0, %s256
      %s258 = sphi 0, %s256
      %s259 = sphi 0, %s258
      %s273 = sphi 0, %s259
      %s277 = sphi 0, %s277
      %s279 = sphi 0, %s277
      %s280 = sphi 0, %s279
      %s294 = sphi 0, %s280
      %s298 = sphi 0, %s298
      %s300 = sphi 0, %s298
      %s301 = sphi 0, %s300
      %s315 = sphi 0, %s301
      %s319 = sphi 0, %s319
      %s321 = sphi 0, %s319
      %s322 = sphi 0, %s321
      %s336 = sphi 0, %s322
      %s340 = sphi 0, %s340
      %s342 = sphi 0, %s340
      %s343 = sphi 0, %s342
      %s357 = sphi 0, %s343
      %s361 = sphi 0, %s361
      %s363 = sphi 0, %s361
      %s364 = sphi 0, %s363
      %s378 = sphi 0, %s364
      %s384 = sphi 0, %s386
      %s387 = sphi 0, %s384
      %s388 = sphi 0, %s387
      %s404 = sphi 0, %s388
    $region4: #{tdnnf_forward.1} parent=1 // loop_header_branch
      %36 = sbr.rel (%p34) target = $region8
    $region5: #{tdnnf_forward.1} parent=1 // loop_body
      %s38 = ssub.s32 %s33, 1
      %s39 = ssub.s32 %s33, 2
      %s40 = sadd.s32 %s33, 1
      %s41 = ssub.s32 %s33, %s40
      %p42 = scmp.eq.s32.totalorder %s41, 0
      %s44 = sadd.s32 %s43, 1
      %s45 = scalar_select %p42, %s43, %s44
      %p48 = pneg %p42
      %p49 = scmp.eq.s32.totalorder %s33, 1
      %p50 = por %p48, %p49
      %p51 = scmp.ne.s32.totalorder %s43, %s46
      %p52 = scmp.eq.s32.totalorder %s33, 0
      %p53 = por %p51, %p52
      %p54 = scmp.ne.s32.totalorder %s43, %s46
      %p55 = scmp.eq.s32.totalorder %s38, 1
      %p56 = por %p54, %p55
      %p57 = scmp.ne.s32.totalorder %s46, %s47
      %p58 = scmp.eq.s32.totalorder %s38, 0
      %p59 = por %p57, %p58
      %p60 = scmp.ne.s32.totalorder %s46, %s47
      %p61 = scmp.eq.s32.totalorder %s39, 1
      %p62 = por %p60, %p61
      %p64 = scmp.ne.s32.totalorder %s47, %s63
      %p65 = scmp.eq.s32.totalorder %s39, 0
      %p66 = por %p64, %p65
      %s68 = sadd.s32 %s67, 1
      %p71 = scmp.eq.s32.totalorder %s33, 1
      %p72 = scmp.ne.s32.totalorder %s67, %s69
      %p73 = scmp.eq.s32.totalorder %s33, 0
      %p74 = por %p72, %p73
      %p75 = scmp.ne.s32.totalorder %s67, %s69
      %p76 = scmp.eq.s32.totalorder %s38, 1
      %p77 = por %p75, %p76
      %p78 = scmp.ne.s32.totalorder %s69, %s70
      %p79 = scmp.eq.s32.totalorder %s38, 0
      %p80 = por %p78, %p79
      %p81 = scmp.ne.s32.totalorder %s69, %s70
      %p82 = scmp.eq.s32.totalorder %s39, 1
      %p83 = por %p81, %p82
      %p85 = scmp.ne.s32.totalorder %s70, %s84
      %p86 = scmp.eq.s32.totalorder %s39, 0
      %p87 = por %p85, %p86
      %s89 = sadd.s32 %s88, 1
      %p92 = scmp.eq.s32.totalorder %s33, 1
      %p93 = scmp.ne.s32.totalorder %s88, %s90
      %p94 = scmp.eq.s32.totalorder %s33, 0
      %p95 = por %p93, %p94
      %p96 = scmp.ne.s32.totalorder %s88, %s90
      %p97 = scmp.eq.s32.totalorder %s38, 1
      %p98 = por %p96, %p97
      %p99 = scmp.ne.s32.totalorder %s90, %s91
      %p100 = scmp.eq.s32.totalorder %s38, 0
      %p101 = por %p99, %p100
      %p102 = scmp.ne.s32.totalorder %s90, %s91
      %p103 = scmp.eq.s32.totalorder %s39, 1
      %p104 = por %p102, %p103
      %p106 = scmp.ne.s32.totalorder %s91, %s105
      %p107 = scmp.eq.s32.totalorder %s39, 0
      %p108 = por %p106, %p107
      %s110 = sadd.s32 %s109, 1
      %p113 = scmp.eq.s32.totalorder %s33, 1
      %p114 = scmp.ne.s32.totalorder %s109, %s111
      %p115 = scmp.eq.s32.totalorder %s33, 0
      %p116 = por %p114, %p115
      %p117 = scmp.ne.s32.totalorder %s109, %s111
      %p118 = scmp.eq.s32.totalorder %s38, 1
      %p119 = por %p117, %p118
      %p120 = scmp.ne.s32.totalorder %s111, %s112
      %p121 = scmp.eq.s32.totalorder %s38, 0
      %p122 = por %p120, %p121
      %p123 = scmp.ne.s32.totalorder %s111, %s112
      %p124 = scmp.eq.s32.totalorder %s39, 1
      %p125 = por %p123, %p124
      %p127 = scmp.ne.s32.totalorder %s112, %s126
      %p128 = scmp.eq.s32.totalorder %s39, 0
      %p129 = por %p127, %p128
      %s131 = sadd.s32 %s130, 1
      %p134 = scmp.eq.s32.totalorder %s33, 1
      %p135 = scmp.ne.s32.totalorder %s130, %s132
      %p136 = scmp.eq.s32.totalorder %s33, 0
      %p137 = por %p135, %p136
      %p138 = scmp.ne.s32.totalorder %s130, %s132
      %p139 = scmp.eq.s32.totalorder %s38, 1
      %p140 = por %p138, %p139
      %p141 = scmp.ne.s32.totalorder %s132, %s133
      %p142 = scmp.eq.s32.totalorder %s38, 0
      %p143 = por %p141, %p142
      %p144 = scmp.ne.s32.totalorder %s132, %s133
      %p145 = scmp.eq.s32.totalorder %s39, 1
      %p146 = por %p144, %p145
      %p148 = scmp.ne.s32.totalorder %s133, %s147
      %p149 = scmp.eq.s32.totalorder %s39, 0
      %p150 = por %p148, %p149
      %s152 = sadd.s32 %s151, 1
      %p155 = scmp.eq.s32.totalorder %s33, 1
      %p156 = scmp.ne.s32.totalorder %s151, %s153
      %p157 = scmp.eq.s32.totalorder %s33, 0
      %p158 = por %p156, %p157
      %p159 = scmp.ne.s32.totalorder %s151, %s153
      %p160 = scmp.eq.s32.totalorder %s38, 1
      %p161 = por %p159, %p160
      %p162 = scmp.ne.s32.totalorder %s153, %s154
      %p163 = scmp.eq.s32.totalorder %s38, 0
      %p164 = por %p162, %p163
      %p165 = scmp.ne.s32.totalorder %s153, %s154
      %p166 = scmp.eq.s32.totalorder %s39, 1
      %p167 = por %p165, %p166
      %p169 = scmp.ne.s32.totalorder %s154, %s168
      %p170 = scmp.eq.s32.totalorder %s39, 0
      %p171 = por %p169, %p170
      %s173 = sadd.s32 %s172, 1
      %p176 = scmp.eq.s32.totalorder %s33, 1
      %p177 = scmp.ne.s32.totalorder %s172, %s174
      %p178 = scmp.eq.s32.totalorder %s33, 0
      %p179 = por %p177, %p178
      %p180 = scmp.ne.s32.totalorder %s172, %s174
      %p181 = scmp.eq.s32.totalorder %s38, 1
      %p182 = por %p180, %p181
      %p183 = scmp.ne.s32.totalorder %s174, %s175
      %p184 = scmp.eq.s32.totalorder %s38, 0
      %p185 = por %p183, %p184
      %p186 = scmp.ne.s32.totalorder %s174, %s175
      %p187 = scmp.eq.s32.totalorder %s39, 1
      %p188 = por %p186, %p187
      %p190 = scmp.ne.s32.totalorder %s175, %s189
      %p191 = scmp.eq.s32.totalorder %s39, 0
      %p192 = por %p190, %p191
      %s194 = sadd.s32 %s193, 1
      %p197 = scmp.eq.s32.totalorder %s33, 1
      %p198 = scmp.ne.s32.totalorder %s193, %s195
      %p199 = scmp.eq.s32.totalorder %s33, 0
      %p200 = por %p198, %p199
      %p201 = scmp.ne.s32.totalorder %s193, %s195
      %p202 = scmp.eq.s32.totalorder %s38, 1
      %p203 = por %p201, %p202
      %p204 = scmp.ne.s32.totalorder %s195, %s196
      %p205 = scmp.eq.s32.totalorder %s38, 0
      %p206 = por %p204, %p205
      %p207 = scmp.ne.s32.totalorder %s195, %s196
      %p208 = scmp.eq.s32.totalorder %s39, 1
      %p209 = por %p207, %p208
      %p211 = scmp.ne.s32.totalorder %s196, %s210
      %p212 = scmp.eq.s32.totalorder %s39, 0
      %p213 = por %p211, %p212
      %s215 = sadd.s32 %s214, 1
      %p218 = scmp.eq.s32.totalorder %s33, 1
      %p219 = scmp.ne.s32.totalorder %s214, %s216
      %p220 = scmp.eq.s32.totalorder %s33, 0
      %p221 = por %p219, %p220
      %p222 = scmp.ne.s32.totalorder %s214, %s216
      %p223 = scmp.eq.s32.totalorder %s38, 1
      %p224 = por %p222, %p223
      %p225 = scmp.ne.s32.totalorder %s216, %s217
      %p226 = scmp.eq.s32.totalorder %s38, 0
      %p227 = por %p225, %p226
      %p228 = scmp.ne.s32.totalorder %s216, %s217
      %p229 = scmp.eq.s32.totalorder %s39, 1
      %p230 = por %p228, %p229
      %p232 = scmp.ne.s32.totalorder %s217, %s231
      %p233 = scmp.eq.s32.totalorder %s39, 0
      %p234 = por %p232, %p233
      %s236 = sadd.s32 %s235, 1
      %p239 = scmp.eq.s32.totalorder %s33, 1
      %p240 = scmp.ne.s32.totalorder %s235, %s237
      %p241 = scmp.eq.s32.totalorder %s33, 0
      %p242 = por %p240, %p241
      %p243 = scmp.ne.s32.totalorder %s235, %s237
      %p244 = scmp.eq.s32.totalorder %s38, 1
      %p245 = por %p243, %p244
      %p246 = scmp.ne.s32.totalorder %s237, %s238
      %p247 = scmp.eq.s32.totalorder %s38, 0
      %p248 = por %p246, %p247
      %p249 = scmp.ne.s32.totalorder %s237, %s238
      %p250 = scmp.eq.s32.totalorder %s39, 1
      %p251 = por %p249, %p250
      %p253 = scmp.ne.s32.totalorder %s238, %s252
      %p254 = scmp.eq.s32.totalorder %s39, 0
      %p255 = por %p253, %p254
      %s257 = sadd.s32 %s256, 1
      %p260 = scmp.eq.s32.totalorder %s33, 1
      %p261 = scmp.ne.s32.totalorder %s256, %s258
      %p262 = scmp.eq.s32.totalorder %s33, 0
      %p263 = por %p261, %p262
      %p264 = scmp.ne.s32.totalorder %s256, %s258
      %p265 = scmp.eq.s32.totalorder %s38, 1
      %p266 = por %p264, %p265
      %p267 = scmp.ne.s32.totalorder %s258, %s259
      %p268 = scmp.eq.s32.totalorder %s38, 0
      %p269 = por %p267, %p268
      %p270 = scmp.ne.s32.totalorder %s258, %s259
      %p271 = scmp.eq.s32.totalorder %s39, 1
      %p272 = por %p270, %p271
      %p274 = scmp.ne.s32.totalorder %s259, %s273
      %p275 = scmp.eq.s32.totalorder %s39, 0
      %p276 = por %p274, %p275
      %s278 = sadd.s32 %s277, 1
      %p281 = scmp.eq.s32.totalorder %s33, 1
      %p282 = scmp.ne.s32.totalorder %s277, %s279
      %p283 = scmp.eq.s32.totalorder %s33, 0
      %p284 = por %p282, %p283
      %p285 = scmp.ne.s32.totalorder %s277, %s279
      %p286 = scmp.eq.s32.totalorder %s38, 1
      %p287 = por %p285, %p286
      %p288 = scmp.ne.s32.totalorder %s279, %s280
      %p289 = scmp.eq.s32.totalorder %s38, 0
      %p290 = por %p288, %p289
      %p291 = scmp.ne.s32.totalorder %s279, %s280
      %p292 = scmp.eq.s32.totalorder %s39, 1
      %p293 = por %p291, %p292
      %p295 = scmp.ne.s32.totalorder %s280, %s294
      %p296 = scmp.eq.s32.totalorder %s39, 0
      %p297 = por %p295, %p296
      %s299 = sadd.s32 %s298, 1
      %p302 = scmp.eq.s32.totalorder %s33, 1
      %p303 = scmp.ne.s32.totalorder %s298, %s300
      %p304 = scmp.eq.s32.totalorder %s33, 0
      %p305 = por %p303, %p304
      %p306 = scmp.ne.s32.totalorder %s298, %s300
      %p307 = scmp.eq.s32.totalorder %s38, 1
      %p308 = por %p306, %p307
      %p309 = scmp.ne.s32.totalorder %s300, %s301
      %p310 = scmp.eq.s32.totalorder %s38, 0
      %p311 = por %p309, %p310
      %p312 = scmp.ne.s32.totalorder %s300, %s301
      %p313 = scmp.eq.s32.totalorder %s39, 1
      %p314 = por %p312, %p313
      %p316 = scmp.ne.s32.totalorder %s301, %s315
      %p317 = scmp.eq.s32.totalorder %s39, 0
      %p318 = por %p316, %p317
      %s320 = sadd.s32 %s319, 1
      %p323 = scmp.eq.s32.totalorder %s33, 1
      %p324 = scmp.ne.s32.totalorder %s319, %s321
      %p325 = scmp.eq.s32.totalorder %s33, 0
      %p326 = por %p324, %p325
      %p327 = scmp.ne.s32.totalorder %s319, %s321
      %p328 = scmp.eq.s32.totalorder %s38, 1
      %p329 = por %p327, %p328
      %p330 = scmp.ne.s32.totalorder %s321, %s322
      %p331 = scmp.eq.s32.totalorder %s38, 0
      %p332 = por %p330, %p331
      %p333 = scmp.ne.s32.totalorder %s321, %s322
      %p334 = scmp.eq.s32.totalorder %s39, 1
      %p335 = por %p333, %p334
      %p337 = scmp.ne.s32.totalorder %s322, %s336
      %p338 = scmp.eq.s32.totalorder %s39, 0
      %p339 = por %p337, %p338
      %s341 = sadd.s32 %s340, 1
      %p344 = scmp.eq.s32.totalorder %s33, 1
      %p345 = scmp.ne.s32.totalorder %s340, %s342
      %p346 = scmp.eq.s32.totalorder %s33, 0
      %p347 = por %p345, %p346
      %p348 = scmp.ne.s32.totalorder %s340, %s342
      %p349 = scmp.eq.s32.totalorder %s38, 1
      %p350 = por %p348, %p349
      %p351 = scmp.ne.s32.totalorder %s342, %s343
      %p352 = scmp.eq.s32.totalorder %s38, 0
      %p353 = por %p351, %p352
      %p354 = scmp.ne.s32.totalorder %s342, %s343
      %p355 = scmp.eq.s32.totalorder %s39, 1
      %p356 = por %p354, %p355
      %p358 = scmp.ne.s32.totalorder %s343, %s357
      %p359 = scmp.eq.s32.totalorder %s39, 0
      %p360 = por %p358, %p359
      %s362 = sadd.s32 %s361, 1
      %p365 = scmp.eq.s32.totalorder %s33, 1
      %p366 = scmp.ne.s32.totalorder %s361, %s363
      %p367 = scmp.eq.s32.totalorder %s33, 0
      %p368 = por %p366, %p367
      %p369 = scmp.ne.s32.totalorder %s361, %s363
      %p370 = scmp.eq.s32.totalorder %s38, 1
      %p371 = por %p369, %p370
      %p372 = scmp.ne.s32.totalorder %s363, %s364
      %p373 = scmp.eq.s32.totalorder %s38, 0
      %p374 = por %p372, %p373
      %p375 = scmp.ne.s32.totalorder %s363, %s364
      %p376 = scmp.eq.s32.totalorder %s39, 1
      %p377 = por %p375, %p376
      %p379 = scmp.ne.s32.totalorder %s364, %s378
      %p380 = scmp.eq.s32.totalorder %s39, 0
      %p381 = por %p379, %p380
      %s382 = ssub.s32 %s33, %s40
      %p383 = scmp.eq.s32.totalorder %s382, 0
      %s385 = sadd.s32 %s384, 1
      %s386 = scalar_select %p383, %s384, %s385
      %p389 = pneg %p383
      %p390 = scmp.eq.s32.totalorder %s33, 1
      %p391 = por %p389, %p390
      %p392 = scmp.ne.s32.totalorder %s384, %s387
      %p393 = scmp.eq.s32.totalorder %s33, 0
      %p394 = por %p392, %p393
      %p395 = scmp.ne.s32.totalorder %s384, %s387
      %p396 = scmp.eq.s32.totalorder %s38, 1
      %p397 = por %p395, %p396
      %p398 = scmp.ne.s32.totalorder %s387, %s388
      %p399 = scmp.eq.s32.totalorder %s38, 0
      %p400 = por %p398, %p399
      %p401 = scmp.ne.s32.totalorder %s387, %s388
      %p402 = scmp.eq.s32.totalorder %s39, 1
      %p403 = por %p401, %p402
      %p405 = scmp.ne.s32.totalorder %s388, %s404
      %p406 = scmp.eq.s32.totalorder %s39, 0
      %p407 = por %p405, %p406
      %p408 = scmp.le.s32.totalorder 1, %s33
      %p409 = scmp.lt.s32.totalorder %s33, 3
      %p410 = pnand %p408, %p409
      %p411 = pneg %p410
      // Predicated region
      $region9: #{tdnnf_forward.1} parent=5 // pred_check
        _
      $region10: #{tdnnf_forward.1} parent=5 // pred_check_branch
        %413 = sbr.rel (%p410) target = $region12
      $region11: #{tdnnf_forward.1} parent=5 // pred_region
        %s414 = ssub.s32 %s33, 1
        // Predicated region
        $region13: #{tdnnf_forward.1} parent=11 // pred_check
          %p415 = pneg %p80
        $region14: #{tdnnf_forward.1} parent=11 // pred_check_branch
          %417 = sbr.rel (%p415) target = $region16
        $region15: #{tdnnf_forward.1} parent=11 // pred_region
          %s419 = ssub.s32 3200, 3200
          %420 = vsyncadd [#allocation8], %s419
          %s421 = sshll.u32 [#allocation7], 4
          %s422 = int_to_ptr.vmem [resolvable:$true] %s421
          %427 = dma.hbm_to_vmem [thread:$0]  %s1, 3200, %s422, [#allocation8], 64, 64, 4
        $region16: #{tdnnf_forward.1} parent=11 // pred_fallthru
          _
        // Predicated region
        $region17: #{tdnnf_forward.1} parent=11 // pred_check
          %p428 = pneg %p101
        $region18: #{tdnnf_forward.1} parent=11 // pred_check_branch
          %430 = sbr.rel (%p428) target = $region20
        $region19: #{tdnnf_forward.1} parent=11 // pred_region
          %s432 = ssub.s32 16, 16
          %433 = vsyncadd [#allocation8], %s432
          %s435 = sshll.u32 [#allocation9], 4
          %s436 = int_to_ptr.vmem [resolvable:$true] %s435
          %438 = dma.hbm_to_vmem [thread:$0]  %s2, 16, %s436, [#allocation8]
        $region20: #{tdnnf_forward.1} parent=11 // pred_fallthru
          _
        // Predicated region
        $region21: #{tdnnf_forward.1} parent=11 // pred_check
          %p439 = pneg %p122
        $region22: #{tdnnf_forward.1} parent=11 // pred_check_branch
          %441 = sbr.rel (%p439) target = $region24
        $region23: #{tdnnf_forward.1} parent=11 // pred_region
          _
        $region24: #{tdnnf_forward.1} parent=11 // pred_fallthru
          _
        // Predicated region
        $region25: #{tdnnf_forward.1} parent=11 // pred_check
          %p442 = pneg %p143
        $region26: #{tdnnf_forward.1} parent=11 // pred_check_branch
          %444 = sbr.rel (%p442) target = $region28
        $region27: #{tdnnf_forward.1} parent=11 // pred_region
          %s446 = ssub.s32 16, 16
          %447 = vsyncadd [#allocation11], %s446
          %s449 = sshll.u32 [#allocation10], 4
          %s450 = int_to_ptr.vmem [resolvable:$true] %s449
          %452 = dma.hbm_to_vmem [thread:$0]  %s4, 16, %s450, [#allocation11]
        $region28: #{tdnnf_forward.1} parent=11 // pred_fallthru
          _
        // Predicated region
        $region29: #{tdnnf_forward.1} parent=11 // pred_check
          %p453 = pneg %p164
        $region30: #{tdnnf_forward.1} parent=11 // pred_check_branch
          %455 = sbr.rel (%p453) target = $region32
        $region31: #{tdnnf_forward.1} parent=11 // pred_region
          %s457 = ssub.s32 6144, 6144
          %458 = vsyncadd [#allocation11], %s457
          %s459 = sshll.u32 [#allocation12], 4
          %s460 = int_to_ptr.vmem [resolvable:$true] %s459
          %465 = dma.hbm_to_vmem [thread:$0]  %s5, 6144, %s460, [#allocation11], 64, 64, 4
        $region32: #{tdnnf_forward.1} parent=11 // pred_fallthru
          _
        // Predicated region
        $region33: #{tdnnf_forward.1} parent=11 // pred_check
          %p466 = pneg %p185
        $region34: #{tdnnf_forward.1} parent=11 // pred_check_branch
          %468 = sbr.rel (%p466) target = $region36
        $region35: #{tdnnf_forward.1} parent=11 // pred_region
          %s470 = ssub.s32 6144, 6144
          %471 = vsyncadd [#allocation14], %s470
          %s472 = sshll.u32 [#allocation13], 4
          %s473 = int_to_ptr.vmem [resolvable:$true] %s472
          %478 = dma.hbm_to_vmem [thread:$0]  %s6, 6144, %s473, [#allocation14], 64, 64, 4
        $region36: #{tdnnf_forward.1} parent=11 // pred_fallthru
          _
        // Predicated region
        $region37: #{tdnnf_forward.1} parent=11 // pred_check
          %p479 = pneg %p206
        $region38: #{tdnnf_forward.1} parent=11 // pred_check_branch
          %481 = sbr.rel (%p479) target = $region40
        $region39: #{tdnnf_forward.1} parent=11 // pred_region
          %s483 = ssub.s32 6144, 6144
          %484 = vsyncadd [#allocation14], %s483
          %s485 = sshll.u32 [#allocation15], 4
          %s486 = int_to_ptr.vmem [resolvable:$true] %s485
          %491 = dma.hbm_to_vmem [thread:$0]  %s7, 6144, %s486, [#allocation14], 64, 64, 4
        $region40: #{tdnnf_forward.1} parent=11 // pred_fallthru
          _
        // Predicated region
        $region41: #{tdnnf_forward.1} parent=11 // pred_check
          %p492 = pneg %p227
        $region42: #{tdnnf_forward.1} parent=11 // pred_check_branch
          %494 = sbr.rel (%p492) target = $region44
        $region43: #{tdnnf_forward.1} parent=11 // pred_region
          _
        $region44: #{tdnnf_forward.1} parent=11 // pred_fallthru
          _
        // Predicated region
        $region45: #{tdnnf_forward.1} parent=11 // pred_check
          %p495 = pneg %p248
        $region46: #{tdnnf_forward.1} parent=11 // pred_check_branch
          %497 = sbr.rel (%p495) target = $region48
        $region47: #{tdnnf_forward.1} parent=11 // pred_region
          _
        $region48: #{tdnnf_forward.1} parent=11 // pred_fallthru
          _
        // Predicated region
        $region49: #{tdnnf_forward.1} parent=11 // pred_check
          %p498 = pneg %p269
        $region50: #{tdnnf_forward.1} parent=11 // pred_check_branch
          %500 = sbr.rel (%p498) target = $region52
        $region51: #{tdnnf_forward.1} parent=11 // pred_region
          %s502 = ssub.s32 1024, 1024
          %503 = vsyncadd [#allocation17], %s502
          %s504 = sshll.u32 [#allocation16], 4
          %s505 = int_to_ptr.vmem [resolvable:$true] %s504
          %510 = dma.hbm_to_vmem [thread:$0]  %s10, 1024, %s505, [#allocation17], 64, 64, 4
        $region52: #{tdnnf_forward.1} parent=11 // pred_fallthru
          _
        // Predicated region
        $region53: #{tdnnf_forward.1} parent=11 // pred_check
          %p511 = pneg %p290
        $region54: #{tdnnf_forward.1} parent=11 // pred_check_branch
          %513 = sbr.rel (%p511) target = $region56
        $region55: #{tdnnf_forward.1} parent=11 // pred_region
          %s515 = ssub.s32 16, 16
          %516 = vsyncadd [#allocation17], %s515
          %s518 = sshll.u32 [#allocation18], 4
          %s519 = int_to_ptr.vmem [resolvable:$true] %s518
          %521 = dma.hbm_to_vmem [thread:$0]  %s11, 16, %s519, [#allocation17]
        $region56: #{tdnnf_forward.1} parent=11 // pred_fallthru
          _
        // Predicated region
        $region57: #{tdnnf_forward.1} parent=11 // pred_check
          %p522 = pneg %p311
        $region58: #{tdnnf_forward.1} parent=11 // pred_check_branch
          %524 = sbr.rel (%p522) target = $region60
        $region59: #{tdnnf_forward.1} parent=11 // pred_region
          %s526 = ssub.s32 1024, 1024
          %527 = vsyncadd [#allocation20], %s526
          %s528 = sshll.u32 [#allocation19], 4
          %s529 = int_to_ptr.vmem [resolvable:$true] %s528
          %534 = dma.hbm_to_vmem [thread:$0]  %s12, 1024, %s529, [#allocation20], 64, 64, 4
        $region60: #{tdnnf_forward.1} parent=11 // pred_fallthru
          _
        // Predicated region
        $region61: #{tdnnf_forward.1} parent=11 // pred_check
          %p535 = pneg %p332
        $region62: #{tdnnf_forward.1} parent=11 // pred_check_branch
          %537 = sbr.rel (%p535) target = $region64
        $region63: #{tdnnf_forward.1} parent=11 // pred_region
          _
        $region64: #{tdnnf_forward.1} parent=11 // pred_fallthru
          _
        // Predicated region
        $region65: #{tdnnf_forward.1} parent=11 // pred_check
          %p538 = pneg %p353
        $region66: #{tdnnf_forward.1} parent=11 // pred_check_branch
          %540 = sbr.rel (%p538) target = $region68
        $region67: #{tdnnf_forward.1} parent=11 // pred_region
          _
        $region68: #{tdnnf_forward.1} parent=11 // pred_fallthru
          _
        // Predicated region
        $region69: #{tdnnf_forward.1} parent=11 // pred_check
          %p541 = pneg %p374
        $region70: #{tdnnf_forward.1} parent=11 // pred_check_branch
          %543 = sbr.rel (%p541) target = $region72
        $region71: #{tdnnf_forward.1} parent=11 // pred_region
          _
        $region72: #{tdnnf_forward.1} parent=11 // pred_fallthru
          _
      $region12: #{tdnnf_forward.1} parent=5 // pred_fallthru
        _
      %p544 = scmp.lt.s32.totalorder %s33, 2
      // Predicated region
      $region73: #{tdnnf_forward.1} parent=5 // pred_check
        %p545 = pneg %p544
      $region74: #{tdnnf_forward.1} parent=5 // pred_check_branch
        %547 = sbr.rel (%p545) target = $region76
      $region75: #{tdnnf_forward.1} parent=5 // pred_region
        // Predicated region
        $region77: #{tdnnf_forward.1} parent=75 // pred_check
          %p548 = pneg %p53
        $region78: #{tdnnf_forward.1} parent=75 // pred_check_branch
          %550 = sbr.rel (%p548) target = $region80
        $region79: #{tdnnf_forward.1} parent=75 // pred_region
          %s551 = sand.u32 %s43, 1
          %s552 = scalar_lea.sflag [#allocation5], %s551
          %s553 = sand.u32 %s43, 1
          %s554 = smul.addr %s553, 16
          %s555 = scalar_lea.vmem [#allocation4], %s554
          %s557 = ssub.s32 256, 256
          %558 = vsyncadd %s552, %s557
          %s559 = smul.addr %s33, 2
          %s560 = smul.addr %s559, 128
          %s561 = scalar_lea.hbm %s0, %s560
          %s562 = sshll.u32 %s555, 4
          %s563 = int_to_ptr.vmem [resolvable:$true] %s562
          %568 = dma.hbm_to_vmem [thread:$0]  %s561, 256, %s563, %s552, 128, 128, 8
        $region80: #{tdnnf_forward.1} parent=75 // pred_fallthru
          _
      $region76: #{tdnnf_forward.1} parent=5 // pred_fallthru
        _
      %p569 = scmp.le.s32.totalorder 1, %s33
      %p570 = scmp.lt.s32.totalorder %s33, 3
      %p571 = pnand %p569, %p570
      %p572 = pneg %p571
      // Predicated region
      $region81: #{tdnnf_forward.1} parent=5 // pred_check
        _
      $region82: #{tdnnf_forward.1} parent=5 // pred_check_branch
        %574 = sbr.rel (%p571) target = $region84
      $region83: #{tdnnf_forward.1} parent=5 // pred_region
        %s575 = ssub.s32 %s33, 1
        %s576 = sand.u32 %s46, 1
        %s577 = scalar_lea.sflag [#allocation5], %s576
        %s578 = sand.u32 %s46, 1
        %s579 = smul.addr %s578, 16
        %s580 = scalar_lea.vmem [#allocation4], %s579
        // Predicated region
        $region85: #{tdnnf_forward.1} parent=83 // pred_check
          %p581 = pneg %p59
        $region86: #{tdnnf_forward.1} parent=83 // pred_check_branch
          %583 = sbr.rel (%p581) target = $region88
        $region87: #{tdnnf_forward.1} parent=83 // pred_region
          %584 = dma.done %s577, 256
        $region88: #{tdnnf_forward.1} parent=83 // pred_fallthru
          _
        // Predicated region
        $region89: #{tdnnf_forward.1} parent=83 // pred_check
          %p585 = pneg %p80
        $region90: #{tdnnf_forward.1} parent=83 // pred_check_branch
          %587 = sbr.rel (%p585) target = $region92
        $region91: #{tdnnf_forward.1} parent=83 // pred_region
          %588 = dma.done [#allocation8], 3200
        $region92: #{tdnnf_forward.1} parent=83 // pred_fallthru
          _
        // Predicated region
        $region93: #{tdnnf_forward.1} parent=83 // pred_check
          %p589 = pneg %p101
        $region94: #{tdnnf_forward.1} parent=83 // pred_check_branch
          %591 = sbr.rel (%p589) target = $region96
        $region95: #{tdnnf_forward.1} parent=83 // pred_region
          %592 = dma.done [#allocation8], 16
        $region96: #{tdnnf_forward.1} parent=83 // pred_fallthru
          _
        // Predicated region
        $region97: #{tdnnf_forward.1} parent=83 // pred_check
          %p593 = pneg %p143
        $region98: #{tdnnf_forward.1} parent=83 // pred_check_branch
          %595 = sbr.rel (%p593) target = $region100
        $region99: #{tdnnf_forward.1} parent=83 // pred_region
          %596 = dma.done [#allocation11], 16
        $region100: #{tdnnf_forward.1} parent=83 // pred_fallthru
          _
        // Predicated region
        $region101: #{tdnnf_forward.1} parent=83 // pred_check
          %p597 = pneg %p164
        $region102: #{tdnnf_forward.1} parent=83 // pred_check_branch
          %599 = sbr.rel (%p597) target = $region104
        $region103: #{tdnnf_forward.1} parent=83 // pred_region
          %600 = dma.done [#allocation11], 6144
        $region104: #{tdnnf_forward.1} parent=83 // pred_fallthru
          _
        // Predicated region
        $region105: #{tdnnf_forward.1} parent=83 // pred_check
          %p601 = pneg %p185
        $region106: #{tdnnf_forward.1} parent=83 // pred_check_branch
          %603 = sbr.rel (%p601) target = $region108
        $region107: #{tdnnf_forward.1} parent=83 // pred_region
          %604 = dma.done [#allocation14], 6144
        $region108: #{tdnnf_forward.1} parent=83 // pred_fallthru
          _
        // Predicated region
        $region109: #{tdnnf_forward.1} parent=83 // pred_check
          %p605 = pneg %p206
        $region110: #{tdnnf_forward.1} parent=83 // pred_check_branch
          %607 = sbr.rel (%p605) target = $region112
        $region111: #{tdnnf_forward.1} parent=83 // pred_region
          %608 = dma.done [#allocation14], 6144
        $region112: #{tdnnf_forward.1} parent=83 // pred_fallthru
          _
        // Predicated region
        $region113: #{tdnnf_forward.1} parent=83 // pred_check
          %p609 = pneg %p269
        $region114: #{tdnnf_forward.1} parent=83 // pred_check_branch
          %611 = sbr.rel (%p609) target = $region116
        $region115: #{tdnnf_forward.1} parent=83 // pred_region
          %612 = dma.done [#allocation17], 1024
        $region116: #{tdnnf_forward.1} parent=83 // pred_fallthru
          _
        // Predicated region
        $region117: #{tdnnf_forward.1} parent=83 // pred_check
          %p613 = pneg %p290
        $region118: #{tdnnf_forward.1} parent=83 // pred_check_branch
          %615 = sbr.rel (%p613) target = $region120
        $region119: #{tdnnf_forward.1} parent=83 // pred_region
          %616 = dma.done [#allocation17], 16
        $region120: #{tdnnf_forward.1} parent=83 // pred_fallthru
          _
        // Predicated region
        $region121: #{tdnnf_forward.1} parent=83 // pred_check
          %p617 = pneg %p311
        $region122: #{tdnnf_forward.1} parent=83 // pred_check_branch
          %619 = sbr.rel (%p617) target = $region124
        $region123: #{tdnnf_forward.1} parent=83 // pred_region
          %620 = dma.done [#allocation20], 1024
        $region124: #{tdnnf_forward.1} parent=83 // pred_fallthru
          _
        %s621 = sand.u32 %s46, 1
        %s622 = scalar_lea.sflag [#allocation5], %s621
        %s623 = sand.u32 %s46, 1
        %s624 = smul.addr %s623, 16
        %s625 = scalar_lea.vmem [#allocation4], %s624
        %p626 = pneg %p59
        %p627 = pneg %p56
        %p628 = pneg %p80
        %p629 = pneg %p77
        %p630 = pneg %p101
        %p631 = pneg %p98
        %p632 = pneg %p122
        %p633 = pneg %p119
        %p634 = pneg %p143
        %p635 = pneg %p140
        %p636 = pneg %p164
        %p637 = pneg %p161
        %p638 = pneg %p185
        %p639 = pneg %p182
        %p640 = pneg %p206
        %p641 = pneg %p203
        %p642 = pneg %p227
        %p643 = pneg %p224
        %p644 = pneg %p248
        %p645 = pneg %p245
        %p646 = pneg %p269
        %p647 = pneg %p266
        %p648 = pneg %p290
        %p649 = pneg %p287
        %p650 = pneg %p311
        %p651 = pneg %p308
        %p652 = pneg %p332
        %p653 = pneg %p329
        %p654 = pneg %p353
        %p655 = pneg %p350
        %p656 = pneg %p374
        %p657 = pneg %p371
        %p658 = pneg %p400
        %p659 = pneg %p397
        %s660 = sand.u32 %s387, 1
        %s661 = scalar_lea.sflag [#allocation6], %s660
        %s662 = sand.u32 %s387, 1
        %s663 = smul.addr %s662, 16
        %s664 = scalar_lea.vmem [#allocation21], %s663
        %v666 = vld [vmem:[%s580] sm:$0xff]
        %v667 = vld [vmem:[%s580 + $0x8] sm:$0xff]
        %v668 = vld [vmem:[#allocation7] sm:$0xf]
        %v669 = vld [vmem:[#allocation7 + $0x4] sm:$0xf]
        %v670 = vld [vmem:[#allocation7 + $0x8] sm:$0xf]
        %v671 = vld [vmem:[#allocation7 + $0xc] sm:$0xf]
        %v672 = vld [vmem:[#allocation7 + $0x10] sm:$0xf]
        %v673 = vld [vmem:[#allocation7 + $0x14] sm:$0xf]
        %v674 = vld [vmem:[#allocation7 + $0x18] sm:$0xf]
        %v675 = vld [vmem:[#allocation7 + $0x1c] sm:$0xf]
        %v676 = vld [vmem:[#allocation7 + $0x20] sm:$0xf]
        %v677 = vld [vmem:[#allocation7 + $0x24] sm:$0xf]
        %s678 = scalar_lea.vmem [#allocation7], 40
        %v679 = vld [vmem:[%s678] sm:$0xf]
        %v680 = vld [vmem:[%s678 + $0x4] sm:$0xf]
        %v681 = vld [vmem:[%s678 + $0x8] sm:$0xf]
        %v682 = vld [vmem:[%s678 + $0xc] sm:$0xf]
        %v683 = vld [vmem:[%s678 + $0x10] sm:$0xf]
        %v684 = vld [vmem:[%s678 + $0x14] sm:$0xf]
        %v685 = vld [vmem:[%s678 + $0x18] sm:$0xf]
        %v686 = vld [vmem:[%s678 + $0x1c] sm:$0xf]
        %v687 = vld [vmem:[%s678 + $0x20] sm:$0xf]
        %v688 = vld [vmem:[%s678 + $0x24] sm:$0xf]
        %s689 = scalar_lea.vmem [#allocation7], 80
        %v690 = vld [vmem:[%s689] sm:$0xf]
        %v691 = vld [vmem:[%s689 + $0x4] sm:$0xf]
        %v692 = vld [vmem:[%s689 + $0x8] sm:$0xf]
        %v693 = vld [vmem:[%s689 + $0xc] sm:$0xf]
        %v694 = vld [vmem:[%s689 + $0x10] sm:$0xf]
        %v695 = vld [vmem:[%s689 + $0x14] sm:$0xf]
        %v696 = vld [vmem:[%s689 + $0x18] sm:$0xf]
        %v697 = vld [vmem:[%s689 + $0x1c] sm:$0xf]
        %v698 = vld [vmem:[%s689 + $0x20] sm:$0xf]
        %v699 = vld [vmem:[%s689 + $0x24] sm:$0xf]
        %s700 = scalar_lea.vmem [#allocation7], 120
        %v701 = vld [vmem:[%s700] sm:$0xf]
        %v702 = vld [vmem:[%s700 + $0x4] sm:$0xf]
        %v703 = vld [vmem:[%s700 + $0x8] sm:$0xf]
        %v704 = vld [vmem:[%s700 + $0xc] sm:$0xf]
        %v705 = vld [vmem:[%s700 + $0x10] sm:$0xf]
        %v706 = vld [vmem:[%s700 + $0x14] sm:$0xf]
        %v707 = vld [vmem:[%s700 + $0x18] sm:$0xf]
        %v708 = vld [vmem:[%s700 + $0x1c] sm:$0xf]
        %v709 = vld [vmem:[%s700 + $0x20] sm:$0xf]
        %v710 = vld [vmem:[%s700 + $0x24] sm:$0xf]
        %s711 = scalar_lea.vmem [#allocation7], 160
        %v712 = vld [vmem:[%s711] sm:$0xf]
        %v713 = vld [vmem:[%s711 + $0x4] sm:$0xf]
        %v714 = vld [vmem:[%s711 + $0x8] sm:$0xf]
        %v715 = vld [vmem:[%s711 + $0xc] sm:$0xf]
        %v716 = vld [vmem:[%s711 + $0x10] sm:$0xf]
        %v717 = vld [vmem:[%s711 + $0x14] sm:$0xf]
        %v718 = vld [vmem:[%s711 + $0x18] sm:$0xf]
        %v719 = vld [vmem:[%s711 + $0x1c] sm:$0xf]
        %v720 = vld [vmem:[%s711 + $0x20] sm:$0xf]
        %v721 = vld [vmem:[%s711 + $0x24] sm:$0xf]
        %vm724 = vcmask 1041408
        %v725 = vrot.slane %v666, 6
        %v726 = vrot.slane %v667, 6
        %v727 = vsel %vm724, %v725, %v726
        %v730 = vsel %vm724, 0.0, %v725
        %v731 = vpack.c.bf16 %v727, %v730
        %vm732 = vcmask 1040384
        %v733 = vrot.slane %v666, 7
        %v734 = vrot.slane %v667, 7
        %v735 = vsel %vm732, %v733, %v734
        %v738 = vsel %vm732, 0.0, %v733
        %v739 = vpack.c.bf16 %v735, %v738
        %v750 = vunpack.c.l.b16 %v679
        %v751 = vunpack.c.l.b16 %v680
        %v752 = vunpack.c.l.b16 %v681
        %v753 = vunpack.c.l.b16 %v682
        %v754 = vunpack.c.l.b16 %v683
        %v755 = vunpack.c.l.b16 %v684
        %v756 = vunpack.c.l.b16 %v685
        %v757 = vunpack.c.l.b16 %v686
        %v758 = vunpack.c.l.b16 %v687
        %v759 = vunpack.c.l.b16 %v688
        %v760 = vpack.c.b16 %v751, %v750
        %v761 = vpack.c.b16 %v753, %v752
        %v762 = vpack.c.b16 %v755, %v754
        %v763 = vpack.c.b16 %v757, %v756
        %v764 = vpack.c.b16 %v759, %v758
        %vm770 = vcmask 654336
        %v772 = vsel %vm770, %v739, 0
        %774 = vmatprep.subr.bf16.mxu0 0
        %775 = vmatpush1.bf16.msra.mxu0 0
        %776 = vmatprep.subr.bf16.mxu0 0
        %777 = vmatpush1.bf16.msra.mxu0 0
        %778 = vmatprep.subr.bf16.mxu0 0
        %779 = vmatpush1.bf16.msra.mxu0 0
        %780 = vmatprep.subr.bf16.mxu0 0
        %781 = vmatpush1.bf16.msra.mxu0 %v764
        %782 = vmatprep.subr.bf16.mxu0 0
        %783 = vmatpush1.bf16.msra.mxu0 %v763
        %784 = vmatprep.subr.bf16.mxu0 0
        %785 = vmatpush1.bf16.msra.mxu0 %v762
        %786 = vmatprep.subr.bf16.mxu0 0
        %787 = vmatpush1.bf16.msra.mxu0 %v761
        %788 = vmatprep.subr.bf16.mxu0 0
        %789 = vmatpush1.bf16.msra.mxu0 %v760
        %790 = vmatprep.subr.bf16.mxu0 0
        %791 = vmatpush2.bf16.msra.mxu0 0
        %792 = vmatprep.subr.bf16.mxu0 0
        %793 = vmatpush2.bf16.msra.mxu0 0
        %794 = vmatprep.subr.bf16.mxu0 0
        %795 = vmatpush2.bf16.msra.mxu0 0
        %796 = vmatprep.subr.bf16.mxu0 0
        %797 = vmatpush2.bf16.msra.mxu0 0
        %798 = vmatprep.subr.bf16.mxu0 0
        %799 = vmatpush2.bf16.msra.mxu0 0
        %800 = vmatprep.subr.bf16.mxu0 0
        %801 = vmatpush2.bf16.msra.mxu0 0
        %802 = vmatprep.subr.bf16.mxu0 0
        %803 = vmatpush2.bf16.msra.mxu0 0
        %804 = vmatprep.subr.bf16.mxu0 0
        %805 = vmatpush2.bf16.msra.mxu0 0
        %806 = vmatprep.mubr.bf16.mxu0 0
        %807 = vmatmul.mubr.bf16.gmra.mxu0 %v772
        %v808 = vpop.f32.mrf.mxu0
        %v809 = vadd.f32 0.0, %v808
        %v810 = vpop.f32.mrf.mxu0
        %v811 = vpop.f32.mrf.mxu0
        %v812 = vadd.f32 0.0, %v811
        %v813 = vpop.f32.mrf.mxu0
        %814 = vdwg.mxu0
        %v825 = vunpack.c.l.b16 %v668
        %v826 = vunpack.c.l.b16 %v669
        %v827 = vunpack.c.l.b16 %v670
        %v828 = vunpack.c.l.b16 %v671
        %v829 = vunpack.c.l.b16 %v672
        %v830 = vunpack.c.l.b16 %v673
        %v831 = vunpack.c.l.b16 %v674
        %v832 = vunpack.c.l.b16 %v675
        %v833 = vunpack.c.l.b16 %v676
        %v834 = vunpack.c.l.b16 %v677
        %v835 = vpack.c.b16 %v826, %v825
        %v836 = vpack.c.b16 %v828, %v827
        %v837 = vpack.c.b16 %v830, %v829
        %v838 = vpack.c.b16 %v832, %v831
        %v839 = vpack.c.b16 %v834, %v833
        %v846 = vsel %vm770, %v731, 0
        %848 = vmatprep.subr.bf16.mxu0 0
        %849 = vmatpush1.bf16.msra.mxu0 0
        %850 = vmatprep.subr.bf16.mxu0 0
        %851 = vmatpush1.bf16.msra.mxu0 0
        %852 = vmatprep.subr.bf16.mxu0 0
        %853 = vmatpush1.bf16.msra.mxu0 0
        %854 = vmatprep.subr.bf16.mxu0 0
        %855 = vmatpush1.bf16.msra.mxu0 %v839
        %856 = vmatprep.subr.bf16.mxu0 0
        %857 = vmatpush1.bf16.msra.mxu0 %v838
        %858 = vmatprep.subr.bf16.mxu0 0
        %859 = vmatpush1.bf16.msra.mxu0 %v837
        %860 = vmatprep.subr.bf16.mxu0 0
        %861 = vmatpush1.bf16.msra.mxu0 %v836
        %862 = vmatprep.subr.bf16.mxu0 0
        %863 = vmatpush1.bf16.msra.mxu0 %v835
        %864 = vmatprep.subr.bf16.mxu0 0
        %865 = vmatpush2.bf16.msra.mxu0 0
        %866 = vmatprep.subr.bf16.mxu0 0
        %867 = vmatpush2.bf16.msra.mxu0 0
        %868 = vmatprep.subr.bf16.mxu0 0
        %869 = vmatpush2.bf16.msra.mxu0 0
        %870 = vmatprep.subr.bf16.mxu0 0
        %871 = vmatpush2.bf16.msra.mxu0 0
        %872 = vmatprep.subr.bf16.mxu0 0
        %873 = vmatpush2.bf16.msra.mxu0 0
        %874 = vmatprep.subr.bf16.mxu0 0
        %875 = vmatpush2.bf16.msra.mxu0 0
        %876 = vmatprep.subr.bf16.mxu0 0
        %877 = vmatpush2.bf16.msra.mxu0 0
        %878 = vmatprep.subr.bf16.mxu0 0
        %879 = vmatpush2.bf16.msra.mxu0 0
        %880 = vmatprep.mubr.bf16.mxu0 0
        %881 = vmatmul.mubr.bf16.gmra.mxu0 %v846
        %v882 = vpop.f32.mrf.mxu0
        %v883 = vadd.f32 %v809, %v882
        %v884 = vpop.f32.mrf.mxu0
        %v885 = vpop.f32.mrf.mxu0
        %v886 = vadd.f32 %v812, %v885
        %v887 = vpop.f32.mrf.mxu0
        %888 = vdwg.mxu0
        %v889 = vpack.c.bf16 %v667, %v666
        %v900 = vunpack.c.l.b16 %v690
        %v901 = vunpack.c.l.b16 %v691
        %v902 = vunpack.c.l.b16 %v692
        %v903 = vunpack.c.l.b16 %v693
        %v904 = vunpack.c.l.b16 %v694
        %v905 = vunpack.c.l.b16 %v695
        %v906 = vunpack.c.l.b16 %v696
        %v907 = vunpack.c.l.b16 %v697
        %v908 = vunpack.c.l.b16 %v698
        %v909 = vunpack.c.l.b16 %v699
        %v910 = vpack.c.b16 %v901, %v900
        %v911 = vpack.c.b16 %v903, %v902
        %v912 = vpack.c.b16 %v905, %v904
        %v913 = vpack.c.b16 %v907, %v906
        %v914 = vpack.c.b16 %v909, %v908
        %v921 = vsel %vm770, %v889, 0
        %923 = vmatprep.subr.bf16.mxu0 0
        %924 = vmatpush1.bf16.msra.mxu0 0
        %925 = vmatprep.subr.bf16.mxu0 0
        %926 = vmatpush1.bf16.msra.mxu0 0
        %927 = vmatprep.subr.bf16.mxu0 0
        %928 = vmatpush1.bf16.msra.mxu0 0
        %929 = vmatprep.subr.bf16.mxu0 0
        %930 = vmatpush1.bf16.msra.mxu0 %v914
        %931 = vmatprep.subr.bf16.mxu0 0
        %932 = vmatpush1.bf16.msra.mxu0 %v913
        %933 = vmatprep.subr.bf16.mxu0 0
        %934 = vmatpush1.bf16.msra.mxu0 %v912
        %935 = vmatprep.subr.bf16.mxu0 0
        %936 = vmatpush1.bf16.msra.mxu0 %v911
        %937 = vmatprep.subr.bf16.mxu0 0
        %938 = vmatpush1.bf16.msra.mxu0 %v910
        %939 = vmatprep.subr.bf16.mxu0 0
        %940 = vmatpush2.bf16.msra.mxu0 0
        %941 = vmatprep.subr.bf16.mxu0 0
        %942 = vmatpush2.bf16.msra.mxu0 0
        %943 = vmatprep.subr.bf16.mxu0 0
        %944 = vmatpush2.bf16.msra.mxu0 0
        %945 = vmatprep.subr.bf16.mxu0 0
        %946 = vmatpush2.bf16.msra.mxu0 0
        %947 = vmatprep.subr.bf16.mxu0 0
        %948 = vmatpush2.bf16.msra.mxu0 0
        %949 = vmatprep.subr.bf16.mxu0 0
        %950 = vmatpush2.bf16.msra.mxu0 0
        %951 = vmatprep.subr.bf16.mxu0 0
        %952 = vmatpush2.bf16.msra.mxu0 0
        %953 = vmatprep.subr.bf16.mxu0 0
        %954 = vmatpush2.bf16.msra.mxu0 0
        %955 = vmatprep.mubr.bf16.mxu0 0
        %956 = vmatmul.mubr.bf16.gmra.mxu0 %v921
        %v957 = vpop.f32.mrf.mxu0
        %v958 = vadd.f32 0.0, %v957
        %v959 = vpop.f32.mrf.mxu0
        %v960 = vpop.f32.mrf.mxu0
        %v961 = vadd.f32 0.0, %v960
        %v962 = vpop.f32.mrf.mxu0
        %963 = vdwg.mxu0
        %v964 = vadd.f32 %v883, %v958
        %v965 = vadd.f32 %v886, %v961
        %vm966 = vcmask 1046528
        %v967 = vrot.slane %v666, 1
        %v968 = vrot.slane %v667, 1
        %v969 = vsel %vm966, %v967, %v968
        %v972 = vsel %vm966, %v968, 0.0
        %v973 = vpack.c.bf16 %v972, %v969
        %v984 = vunpack.c.l.b16 %v701
        %v985 = vunpack.c.l.b16 %v702
        %v986 = vunpack.c.l.b16 %v703
        %v987 = vunpack.c.l.b16 %v704
        %v988 = vunpack.c.l.b16 %v705
        %v989 = vunpack.c.l.b16 %v706
        %v990 = vunpack.c.l.b16 %v707
        %v991 = vunpack.c.l.b16 %v708
        %v992 = vunpack.c.l.b16 %v709
        %v993 = vunpack.c.l.b16 %v710
        %v994 = vpack.c.b16 %v985, %v984
        %v995 = vpack.c.b16 %v987, %v986
        %v996 = vpack.c.b16 %v989, %v988
        %v997 = vpack.c.b16 %v991, %v990
        %v998 = vpack.c.b16 %v993, %v992
        %v1005 = vsel %vm770, %v973, 0
        %1007 = vmatprep.subr.bf16.mxu0 0
        %1008 = vmatpush1.bf16.msra.mxu0 0
        %1009 = vmatprep.subr.bf16.mxu0 0
        %1010 = vmatpush1.bf16.msra.mxu0 0
        %1011 = vmatprep.subr.bf16.mxu0 0
        %1012 = vmatpush1.bf16.msra.mxu0 0
        %1013 = vmatprep.subr.bf16.mxu0 0
        %1014 = vmatpush1.bf16.msra.mxu0 %v998
        %1015 = vmatprep.subr.bf16.mxu0 0
        %1016 = vmatpush1.bf16.msra.mxu0 %v997
        %1017 = vmatprep.subr.bf16.mxu0 0
        %1018 = vmatpush1.bf16.msra.mxu0 %v996
        %1019 = vmatprep.subr.bf16.mxu0 0
        %1020 = vmatpush1.bf16.msra.mxu0 %v995
        %1021 = vmatprep.subr.bf16.mxu0 0
        %1022 = vmatpush1.bf16.msra.mxu0 %v994
        %1023 = vmatprep.subr.bf16.mxu0 0
        %1024 = vmatpush2.bf16.msra.mxu0 0
        %1025 = vmatprep.subr.bf16.mxu0 0
        %1026 = vmatpush2.bf16.msra.mxu0 0
        %1027 = vmatprep.subr.bf16.mxu0 0
        %1028 = vmatpush2.bf16.msra.mxu0 0
        %1029 = vmatprep.subr.bf16.mxu0 0
        %1030 = vmatpush2.bf16.msra.mxu0 0
        %1031 = vmatprep.subr.bf16.mxu0 0
        %1032 = vmatpush2.bf16.msra.mxu0 0
        %1033 = vmatprep.subr.bf16.mxu0 0
        %1034 = vmatpush2.bf16.msra.mxu0 0
        %1035 = vmatprep.subr.bf16.mxu0 0
        %1036 = vmatpush2.bf16.msra.mxu0 0
        %1037 = vmatprep.subr.bf16.mxu0 0
        %1038 = vmatpush2.bf16.msra.mxu0 0
        %1039 = vmatprep.mubr.bf16.mxu0 0
        %1040 = vmatmul.mubr.bf16.gmra.mxu0 %v1005
        %v1041 = vpop.f32.mrf.mxu0
        %v1042 = vadd.f32 0.0, %v1041
        %v1043 = vpop.f32.mrf.mxu0
        %v1044 = vpop.f32.mrf.mxu0
        %v1045 = vadd.f32 0.0, %v1044
        %v1046 = vpop.f32.mrf.mxu0
        %1047 = vdwg.mxu0
        %v1048 = vadd.f32 %v964, %v1042
        %v1049 = vadd.f32 %v965, %v1045
        %vm1050 = vcmask 1045504
        %v1051 = vrot.slane %v666, 2
        %v1052 = vrot.slane %v667, 2
        %v1053 = vsel %vm1050, %v1051, %v1052
        %v1056 = vsel %vm1050, %v1052, 0.0
        %v1057 = vpack.c.bf16 %v1056, %v1053
        %v1068 = vunpack.c.l.b16 %v712
        %v1069 = vunpack.c.l.b16 %v713
        %v1070 = vunpack.c.l.b16 %v714
        %v1071 = vunpack.c.l.b16 %v715
        %v1072 = vunpack.c.l.b16 %v716
        %v1073 = vunpack.c.l.b16 %v717
        %v1074 = vunpack.c.l.b16 %v718
        %v1075 = vunpack.c.l.b16 %v719
        %v1076 = vunpack.c.l.b16 %v720
        %v1077 = vunpack.c.l.b16 %v721
        %v1078 = vpack.c.b16 %v1069, %v1068
        %v1079 = vpack.c.b16 %v1071, %v1070
        %v1080 = vpack.c.b16 %v1073, %v1072
        %v1081 = vpack.c.b16 %v1075, %v1074
        %v1082 = vpack.c.b16 %v1077, %v1076
        %v1089 = vsel %vm770, %v1057, 0
        %1091 = vmatprep.subr.bf16.mxu0 0
        %1092 = vmatpush1.bf16.msra.mxu0 0
        %1093 = vmatprep.subr.bf16.mxu0 0
        %1094 = vmatpush1.bf16.msra.mxu0 0
        %1095 = vmatprep.subr.bf16.mxu0 0
        %1096 = vmatpush1.bf16.msra.mxu0 0
        %1097 = vmatprep.subr.bf16.mxu0 0
        %1098 = vmatpush1.bf16.msra.mxu0 %v1082
        %1099 = vmatprep.subr.bf16.mxu0 0
        %1100 = vmatpush1.bf16.msra.mxu0 %v1081
        %1101 = vmatprep.subr.bf16.mxu0 0
        %1102 = vmatpush1.bf16.msra.mxu0 %v1080
        %1103 = vmatprep.subr.bf16.mxu0 0
        %1104 = vmatpush1.bf16.msra.mxu0 %v1079
        %1105 = vmatprep.subr.bf16.mxu0 0
        %1106 = vmatpush1.bf16.msra.mxu0 %v1078
        %1107 = vmatprep.subr.bf16.mxu0 0
        %1108 = vmatpush2.bf16.msra.mxu0 0
        %1109 = vmatprep.subr.bf16.mxu0 0
        %1110 = vmatpush2.bf16.msra.mxu0 0
        %1111 = vmatprep.subr.bf16.mxu0 0
        %1112 = vmatpush2.bf16.msra.mxu0 0
        %1113 = vmatprep.subr.bf16.mxu0 0
        %1114 = vmatpush2.bf16.msra.mxu0 0
        %1115 = vmatprep.subr.bf16.mxu0 0
        %1116 = vmatpush2.bf16.msra.mxu0 0
        %1117 = vmatprep.subr.bf16.mxu0 0
        %1118 = vmatpush2.bf16.msra.mxu0 0
        %1119 = vmatprep.subr.bf16.mxu0 0
        %1120 = vmatpush2.bf16.msra.mxu0 0
        %1121 = vmatprep.subr.bf16.mxu0 0
        %1122 = vmatpush2.bf16.msra.mxu0 0
        %1123 = vmatprep.mubr.bf16.mxu0 0
        %1124 = vmatmul.mubr.bf16.gmra.mxu0 %v1089
        %v1125 = vpop.f32.mrf.mxu0
        %v1126 = vadd.f32 0.0, %v1125
        %v1127 = vpop.f32.mrf.mxu0
        %v1128 = vpop.f32.mrf.mxu0
        %v1129 = vadd.f32 0.0, %v1128
        %v1130 = vpop.f32.mrf.mxu0
        %1131 = vdwg.mxu0
        %v1132 = vadd.f32 %v1048, %v1126
        %v1133 = vadd.f32 %v1049, %v1129
        %v1134 = vld [vmem:[#allocation9] sm:$0x1]
        %v1136 = vlaneseq
        %v1137 = vshrl.u32 %v1136, 7
        %v1138 = vsub.s32 0, %v1137
        %v1139 = vrot.slane %v1134, %v1138
        %v1141 = vadd.f32 %v1132, %v1139
        %v1142 = vadd.f32 %v1133, %v1139
        %v1143 = vmax.f32 %v1141, 0.0
        %v1144 = vmax.f32 %v1142, 0.0
        %v1145 = vld [vmem:[%s3] sm:$0x1]
        %v1147 = vlaneseq
        %v1148 = vshrl.u32 %v1147, 7
        %v1149 = vsub.s32 0, %v1148
        %v1150 = vrot.slane %v1145, %v1149
        %v1152 = vmul.f32 %v1143, %v1150
        %v1153 = vmul.f32 %v1144, %v1150
        %v1154 = vld [vmem:[#allocation10] sm:$0x1]
        %v1156 = vlaneseq
        %v1157 = vshrl.u32 %v1156, 7
        %v1158 = vsub.s32 0, %v1157
        %v1159 = vrot.slane %v1154, %v1158
        %v1161 = vadd.f32 %v1152, %v1159
        %v1162 = vadd.f32 %v1153, %v1159
        %1163 = vst [vmem:[#allocation2] sm:$0xff] %v1161
        %1164 = vst [vmem:[#allocation2 + $0x8] sm:$0xff] %v1162
        %1165 = vst [vmem:[#allocation3] sm:$0xff] 0.0
        %1166 = vst [vmem:[#allocation3 + $0x8] sm:$0xff] 0.0
        loop: start=0, step=1, limit=3
        $region125: #{tdnnf_forward.1} parent=83 // loop_pre_header
          _
        $region126: #{tdnnf_forward.1} parent=83 // loop_header
          %s1168 = sphi 0, %s1172
          %p1169 = scmp.ge.s32.totalorder %s1168, 3
        $region127: #{tdnnf_forward.1} parent=83 // loop_header_branch
          %1171 = sbr.rel (%p1169) target = $region131
        $region128: #{tdnnf_forward.1} parent=83 // loop_body
          %v1173 = vld [vmem:[#allocation2] sm:$0xff]
          %v1174 = vld [vmem:[#allocation2 + $0x8] sm:$0xff]
          %v1175 = vld [vmem:[#allocation3] sm:$0xff]
          %v1176 = vld [vmem:[#allocation3 + $0x8] sm:$0xff]
          %v1177 = vmul.f32 %v1175, 0.66
          %v1178 = vmul.f32 %v1176, 0.66
          %v1179 = vadd.f32 %v1173, %v1177
          %v1180 = vadd.f32 %v1174, %v1178
          %s1181 = smul.u32 %s1168, 2
          %s1182 = smul.u32 %s1181, 16
          %s1183 = smul.addr %s1182, 4
          %s1184 = scalar_lea.vmem [#allocation12], %s1183
          %v1185 = vld [vmem:[%s1184] sm:$0xf]
          %v1186 = vld [vmem:[%s1184 + $0x4] sm:$0xf]
          %v1187 = vld [vmem:[%s1184 + $0x8] sm:$0xf]
          %v1188 = vld [vmem:[%s1184 + $0xc] sm:$0xf]
          %v1189 = vld [vmem:[%s1184 + $0x10] sm:$0xf]
          %v1190 = vld [vmem:[%s1184 + $0x14] sm:$0xf]
          %v1191 = vld [vmem:[%s1184 + $0x18] sm:$0xf]
          %v1192 = vld [vmem:[%s1184 + $0x1c] sm:$0xf]
          %v1193 = vld [vmem:[%s1184 + $0x20] sm:$0xf]
          %v1194 = vld [vmem:[%s1184 + $0x24] sm:$0xf]
          %v1195 = vld [vmem:[%s1184 + $0x28] sm:$0xf]
          %v1196 = vld [vmem:[%s1184 + $0x2c] sm:$0xf]
          %v1197 = vld [vmem:[%s1184 + $0x30] sm:$0xf]
          %v1198 = vld [vmem:[%s1184 + $0x34] sm:$0xf]
          %v1199 = vld [vmem:[%s1184 + $0x38] sm:$0xf]
          %v1200 = vld [vmem:[%s1184 + $0x3c] sm:$0xf]
          %s1201 = sadd.s32 %s1181, 1
          %s1202 = smul.u32 %s1201, 16
          %s1203 = smul.addr %s1202, 4
          %s1204 = scalar_lea.vmem [#allocation12], %s1203
          %v1205 = vld [vmem:[%s1204] sm:$0xf]
          %v1206 = vld [vmem:[%s1204 + $0x4] sm:$0xf]
          %v1207 = vld [vmem:[%s1204 + $0x8] sm:$0xf]
          %v1208 = vld [vmem:[%s1204 + $0xc] sm:$0xf]
          %v1209 = vld [vmem:[%s1204 + $0x10] sm:$0xf]
          %v1210 = vld [vmem:[%s1204 + $0x14] sm:$0xf]
          %v1211 = vld [vmem:[%s1204 + $0x18] sm:$0xf]
          %v1212 = vld [vmem:[%s1204 + $0x1c] sm:$0xf]
          %v1213 = vld [vmem:[%s1204 + $0x20] sm:$0xf]
          %v1214 = vld [vmem:[%s1204 + $0x24] sm:$0xf]
          %v1215 = vld [vmem:[%s1204 + $0x28] sm:$0xf]
          %v1216 = vld [vmem:[%s1204 + $0x2c] sm:$0xf]
          %v1217 = vld [vmem:[%s1204 + $0x30] sm:$0xf]
          %v1218 = vld [vmem:[%s1204 + $0x34] sm:$0xf]
          %v1219 = vld [vmem:[%s1204 + $0x38] sm:$0xf]
          %v1220 = vld [vmem:[%s1204 + $0x3c] sm:$0xf]
          %v1223 = vrot.slane %v1179, 7
          %v1224 = vrot.slane %v1180, 7
          %v1225 = vsel %vm732, %v1223, %v1224
          %v1228 = vsel %vm732, 0.0, %v1223
          %v1229 = vpack.c.bf16 %v1225, %v1228
          %v1230 = vrot.slane %v1179, 1
          %v1231 = vrot.slane %v1180, 1
          %v1232 = vsel %vm966, %v1230, %v1231
          %v1235 = vsel %vm966, %v1231, 0.0
          %v1236 = vpack.c.bf16 %v1235, %v1232
          %v1253 = vunpack.c.l.b16 %v1205
          %v1254 = vunpack.c.l.b16 %v1206
          %v1255 = vunpack.c.l.b16 %v1207
          %v1256 = vunpack.c.l.b16 %v1208
          %v1257 = vunpack.c.l.b16 %v1209
          %v1258 = vunpack.c.l.b16 %v1210
          %v1259 = vunpack.c.l.b16 %v1211
          %v1260 = vunpack.c.l.b16 %v1212
          %v1261 = vunpack.c.l.b16 %v1213
          %v1262 = vunpack.c.l.b16 %v1214
          %v1263 = vunpack.c.l.b16 %v1215
          %v1264 = vunpack.c.l.b16 %v1216
          %v1265 = vunpack.c.l.b16 %v1217
          %v1266 = vunpack.c.l.b16 %v1218
          %v1267 = vunpack.c.l.b16 %v1219
          %v1268 = vunpack.c.l.b16 %v1220
          %v1269 = vpack.c.b16 %v1254, %v1253
          %v1270 = vpack.c.b16 %v1256, %v1255
          %v1271 = vpack.c.b16 %v1258, %v1257
          %v1272 = vpack.c.b16 %v1260, %v1259
          %v1273 = vpack.c.b16 %v1262, %v1261
          %v1274 = vpack.c.b16 %v1264, %v1263
          %v1275 = vpack.c.b16 %v1266, %v1265
          %v1276 = vpack.c.b16 %v1268, %v1267
          %1285 = vmatprep.subr.bf16.mxu0 0
          %1286 = vmatpush1.bf16.msra.mxu0 %v1276
          %1287 = vmatprep.subr.bf16.mxu0 0
          %1288 = vmatpush1.bf16.msra.mxu0 %v1275
          %1289 = vmatprep.subr.bf16.mxu0 0
          %1290 = vmatpush1.bf16.msra.mxu0 %v1274
          %1291 = vmatprep.subr.bf16.mxu0 0
          %1292 = vmatpush1.bf16.msra.mxu0 %v1273
          %1293 = vmatprep.subr.bf16.mxu0 0
          %1294 = vmatpush1.bf16.msra.mxu0 %v1272
          %1295 = vmatprep.subr.bf16.mxu0 0
          %1296 = vmatpush1.bf16.msra.mxu0 %v1271
          %1297 = vmatprep.subr.bf16.mxu0 0
          %1298 = vmatpush1.bf16.msra.mxu0 %v1270
          %1299 = vmatprep.subr.bf16.mxu0 0
          %1300 = vmatpush1.bf16.msra.mxu0 %v1269
          %1301 = vmatprep.subr.bf16.mxu0 0
          %1302 = vmatpush2.bf16.msra.mxu0 0
          %1303 = vmatprep.subr.bf16.mxu0 0
          %1304 = vmatpush2.bf16.msra.mxu0 0
          %1305 = vmatprep.subr.bf16.mxu0 0
          %1306 = vmatpush2.bf16.msra.mxu0 0
          %1307 = vmatprep.subr.bf16.mxu0 0
          %1308 = vmatpush2.bf16.msra.mxu0 0
          %1309 = vmatprep.subr.bf16.mxu0 0
          %1310 = vmatpush2.bf16.msra.mxu0 0
          %1311 = vmatprep.subr.bf16.mxu0 0
          %1312 = vmatpush2.bf16.msra.mxu0 0
          %1313 = vmatprep.subr.bf16.mxu0 0
          %1314 = vmatpush2.bf16.msra.mxu0 0
          %1315 = vmatprep.subr.bf16.mxu0 0
          %1316 = vmatpush2.bf16.msra.mxu0 0
          %1317 = vmatprep.mubr.bf16.mxu0 0
          %1318 = vmatmul.mubr.bf16.gmra.mxu0 %v1236
          %v1319 = vpop.f32.mrf.mxu0
          %v1320 = vadd.f32 0.0, %v1319
          %v1321 = vpop.f32.mrf.mxu0
          %v1322 = vpop.f32.mrf.mxu0
          %v1323 = vadd.f32 0.0, %v1322
          %v1324 = vpop.f32.mrf.mxu0
          %1325 = vdwg.mxu0
          %v1342 = vunpack.c.l.b16 %v1185
          %v1343 = vunpack.c.l.b16 %v1186
          %v1344 = vunpack.c.l.b16 %v1187
          %v1345 = vunpack.c.l.b16 %v1188
          %v1346 = vunpack.c.l.b16 %v1189
          %v1347 = vunpack.c.l.b16 %v1190
          %v1348 = vunpack.c.l.b16 %v1191
          %v1349 = vunpack.c.l.b16 %v1192
          %v1350 = vunpack.c.l.b16 %v1193
          %v1351 = vunpack.c.l.b16 %v1194
          %v1352 = vunpack.c.l.b16 %v1195
          %v1353 = vunpack.c.l.b16 %v1196
          %v1354 = vunpack.c.l.b16 %v1197
          %v1355 = vunpack.c.l.b16 %v1198
          %v1356 = vunpack.c.l.b16 %v1199
          %v1357 = vunpack.c.l.b16 %v1200
          %v1358 = vpack.c.b16 %v1343, %v1342
          %v1359 = vpack.c.b16 %v1345, %v1344
          %v1360 = vpack.c.b16 %v1347, %v1346
          %v1361 = vpack.c.b16 %v1349, %v1348
          %v1362 = vpack.c.b16 %v1351, %v1350
          %v1363 = vpack.c.b16 %v1353, %v1352
          %v1364 = vpack.c.b16 %v1355, %v1354
          %v1365 = vpack.c.b16 %v1357, %v1356
          %1374 = vmatprep.subr.bf16.mxu0 0
          %1375 = vmatpush1.bf16.msra.mxu0 %v1365
          %1376 = vmatprep.subr.bf16.mxu0 0
          %1377 = vmatpush1.bf16.msra.mxu0 %v1364
          %1378 = vmatprep.subr.bf16.mxu0 0
          %1379 = vmatpush1.bf16.msra.mxu0 %v1363
          %1380 = vmatprep.subr.bf16.mxu0 0
          %1381 = vmatpush1.bf16.msra.mxu0 %v1362
          %1382 = vmatprep.subr.bf16.mxu0 0
          %1383 = vmatpush1.bf16.msra.mxu0 %v1361
          %1384 = vmatprep.subr.bf16.mxu0 0
          %1385 = vmatpush1.bf16.msra.mxu0 %v1360
          %1386 = vmatprep.subr.bf16.mxu0 0
          %1387 = vmatpush1.bf16.msra.mxu0 %v1359
          %1388 = vmatprep.subr.bf16.mxu0 0
          %1389 = vmatpush1.bf16.msra.mxu0 %v1358
          %1390 = vmatprep.subr.bf16.mxu0 0
          %1391 = vmatpush2.bf16.msra.mxu0 0
          %1392 = vmatprep.subr.bf16.mxu0 0
          %1393 = vmatpush2.bf16.msra.mxu0 0
          %1394 = vmatprep.subr.bf16.mxu0 0
          %1395 = vmatpush2.bf16.msra.mxu0 0
          %1396 = vmatprep.subr.bf16.mxu0 0
          %1397 = vmatpush2.bf16.msra.mxu0 0
          %1398 = vmatprep.subr.bf16.mxu0 0
          %1399 = vmatpush2.bf16.msra.mxu0 0
          %1400 = vmatprep.subr.bf16.mxu0 0
          %1401 = vmatpush2.bf16.msra.mxu0 0
          %1402 = vmatprep.subr.bf16.mxu0 0
          %1403 = vmatpush2.bf16.msra.mxu0 0
          %1404 = vmatprep.subr.bf16.mxu0 0
          %1405 = vmatpush2.bf16.msra.mxu0 0
          %1406 = vmatprep.mubr.bf16.mxu0 0
          %1407 = vmatmul.mubr.bf16.gmra.mxu0 %v1229
          %v1408 = vpop.f32.mrf.mxu0
          %v1409 = vadd.f32 %v1320, %v1408
          %v1410 = vpop.f32.mrf.mxu0
          %v1411 = vpop.f32.mrf.mxu0
          %v1412 = vadd.f32 %v1323, %v1411
          %v1413 = vpop.f32.mrf.mxu0
          %1414 = vdwg.mxu0
          %s1415 = smul.addr %s1182, 4
          %s1416 = scalar_lea.vmem [#allocation13], %s1415
          %v1417 = vld [vmem:[%s1416] sm:$0xf]
          %v1418 = vld [vmem:[%s1416 + $0x4] sm:$0xf]
          %v1419 = vld [vmem:[%s1416 + $0x8] sm:$0xf]
          %v1420 = vld [vmem:[%s1416 + $0xc] sm:$0xf]
          %v1421 = vld [vmem:[%s1416 + $0x10] sm:$0xf]
          %v1422 = vld [vmem:[%s1416 + $0x14] sm:$0xf]
          %v1423 = vld [vmem:[%s1416 + $0x18] sm:$0xf]
          %v1424 = vld [vmem:[%s1416 + $0x1c] sm:$0xf]
          %v1425 = vld [vmem:[%s1416 + $0x20] sm:$0xf]
          %v1426 = vld [vmem:[%s1416 + $0x24] sm:$0xf]
          %v1427 = vld [vmem:[%s1416 + $0x28] sm:$0xf]
          %v1428 = vld [vmem:[%s1416 + $0x2c] sm:$0xf]
          %v1429 = vld [vmem:[%s1416 + $0x30] sm:$0xf]
          %v1430 = vld [vmem:[%s1416 + $0x34] sm:$0xf]
          %v1431 = vld [vmem:[%s1416 + $0x38] sm:$0xf]
          %v1432 = vld [vmem:[%s1416 + $0x3c] sm:$0xf]
          %s1433 = smul.addr %s1202, 4
          %s1434 = scalar_lea.vmem [#allocation13], %s1433
          %v1435 = vld [vmem:[%s1434] sm:$0xf]
          %v1436 = vld [vmem:[%s1434 + $0x4] sm:$0xf]
          %v1437 = vld [vmem:[%s1434 + $0x8] sm:$0xf]
          %v1438 = vld [vmem:[%s1434 + $0xc] sm:$0xf]
          %v1439 = vld [vmem:[%s1434 + $0x10] sm:$0xf]
          %v1440 = vld [vmem:[%s1434 + $0x14] sm:$0xf]
          %v1441 = vld [vmem:[%s1434 + $0x18] sm:$0xf]
          %v1442 = vld [vmem:[%s1434 + $0x1c] sm:$0xf]
          %v1443 = vld [vmem:[%s1434 + $0x20] sm:$0xf]
          %v1444 = vld [vmem:[%s1434 + $0x24] sm:$0xf]
          %v1445 = vld [vmem:[%s1434 + $0x28] sm:$0xf]
          %v1446 = vld [vmem:[%s1434 + $0x2c] sm:$0xf]
          %v1447 = vld [vmem:[%s1434 + $0x30] sm:$0xf]
          %v1448 = vld [vmem:[%s1434 + $0x34] sm:$0xf]
          %v1449 = vld [vmem:[%s1434 + $0x38] sm:$0xf]
          %v1450 = vld [vmem:[%s1434 + $0x3c] sm:$0xf]
          %v1453 = vrot.slane %v1409, 7
          %v1454 = vrot.slane %v1412, 7
          %v1455 = vsel %vm732, %v1453, %v1454
          %v1458 = vsel %vm732, 0.0, %v1453
          %v1459 = vpack.c.bf16 %v1455, %v1458
          %v1460 = vrot.slane %v1409, 1
          %v1461 = vrot.slane %v1412, 1
          %v1462 = vsel %vm966, %v1460, %v1461
          %v1465 = vsel %vm966, %v1461, 0.0
          %v1466 = vpack.c.bf16 %v1465, %v1462
          %v1483 = vunpack.c.l.b16 %v1435
          %v1484 = vunpack.c.l.b16 %v1436
          %v1485 = vunpack.c.l.b16 %v1437
          %v1486 = vunpack.c.l.b16 %v1438
          %v1487 = vunpack.c.l.b16 %v1439
          %v1488 = vunpack.c.l.b16 %v1440
          %v1489 = vunpack.c.l.b16 %v1441
          %v1490 = vunpack.c.l.b16 %v1442
          %v1491 = vunpack.c.l.b16 %v1443
          %v1492 = vunpack.c.l.b16 %v1444
          %v1493 = vunpack.c.l.b16 %v1445
          %v1494 = vunpack.c.l.b16 %v1446
          %v1495 = vunpack.c.l.b16 %v1447
          %v1496 = vunpack.c.l.b16 %v1448
          %v1497 = vunpack.c.l.b16 %v1449
          %v1498 = vunpack.c.l.b16 %v1450
          %v1499 = vpack.c.b16 %v1484, %v1483
          %v1500 = vpack.c.b16 %v1486, %v1485
          %v1501 = vpack.c.b16 %v1488, %v1487
          %v1502 = vpack.c.b16 %v1490, %v1489
          %v1503 = vpack.c.b16 %v1492, %v1491
          %v1504 = vpack.c.b16 %v1494, %v1493
          %v1505 = vpack.c.b16 %v1496, %v1495
          %v1506 = vpack.c.b16 %v1498, %v1497
          %1515 = vmatprep.subr.bf16.mxu0 0
          %1516 = vmatpush1.bf16.msra.mxu0 %v1506
          %1517 = vmatprep.subr.bf16.mxu0 0
          %1518 = vmatpush1.bf16.msra.mxu0 %v1505
          %1519 = vmatprep.subr.bf16.mxu0 0
          %1520 = vmatpush1.bf16.msra.mxu0 %v1504
          %1521 = vmatprep.subr.bf16.mxu0 0
          %1522 = vmatpush1.bf16.msra.mxu0 %v1503
          %1523 = vmatprep.subr.bf16.mxu0 0
          %1524 = vmatpush1.bf16.msra.mxu0 %v1502
          %1525 = vmatprep.subr.bf16.mxu0 0
          %1526 = vmatpush1.bf16.msra.mxu0 %v1501
          %1527 = vmatprep.subr.bf16.mxu0 0
          %1528 = vmatpush1.bf16.msra.mxu0 %v1500
          %1529 = vmatprep.subr.bf16.mxu0 0
          %1530 = vmatpush1.bf16.msra.mxu0 %v1499
          %1531 = vmatprep.subr.bf16.mxu0 0
          %1532 = vmatpush2.bf16.msra.mxu0 0
          %1533 = vmatprep.subr.bf16.mxu0 0
          %1534 = vmatpush2.bf16.msra.mxu0 0
          %1535 = vmatprep.subr.bf16.mxu0 0
          %1536 = vmatpush2.bf16.msra.mxu0 0
          %1537 = vmatprep.subr.bf16.mxu0 0
          %1538 = vmatpush2.bf16.msra.mxu0 0
          %1539 = vmatprep.subr.bf16.mxu0 0
          %1540 = vmatpush2.bf16.msra.mxu0 0
          %1541 = vmatprep.subr.bf16.mxu0 0
          %1542 = vmatpush2.bf16.msra.mxu0 0
          %1543 = vmatprep.subr.bf16.mxu0 0
          %1544 = vmatpush2.bf16.msra.mxu0 0
          %1545 = vmatprep.subr.bf16.mxu0 0
          %1546 = vmatpush2.bf16.msra.mxu0 0
          %1547 = vmatprep.mubr.bf16.mxu0 0
          %1548 = vmatmul.mubr.bf16.gmra.mxu0 %v1466
          %v1549 = vpop.f32.mrf.mxu0
          %v1550 = vadd.f32 0.0, %v1549
          %v1551 = vpop.f32.mrf.mxu0
          %v1552 = vpop.f32.mrf.mxu0
          %v1553 = vadd.f32 0.0, %v1552
          %v1554 = vpop.f32.mrf.mxu0
          %1555 = vdwg.mxu0
          %v1572 = vunpack.c.l.b16 %v1417
          %v1573 = vunpack.c.l.b16 %v1418
          %v1574 = vunpack.c.l.b16 %v1419
          %v1575 = vunpack.c.l.b16 %v1420
          %v1576 = vunpack.c.l.b16 %v1421
          %v1577 = vunpack.c.l.b16 %v1422
          %v1578 = vunpack.c.l.b16 %v1423
          %v1579 = vunpack.c.l.b16 %v1424
          %v1580 = vunpack.c.l.b16 %v1425
          %v1581 = vunpack.c.l.b16 %v1426
          %v1582 = vunpack.c.l.b16 %v1427
          %v1583 = vunpack.c.l.b16 %v1428
          %v1584 = vunpack.c.l.b16 %v1429
          %v1585 = vunpack.c.l.b16 %v1430
          %v1586 = vunpack.c.l.b16 %v1431
          %v1587 = vunpack.c.l.b16 %v1432
          %v1588 = vpack.c.b16 %v1573, %v1572
          %v1589 = vpack.c.b16 %v1575, %v1574
          %v1590 = vpack.c.b16 %v1577, %v1576
          %v1591 = vpack.c.b16 %v1579, %v1578
          %v1592 = vpack.c.b16 %v1581, %v1580
          %v1593 = vpack.c.b16 %v1583, %v1582
          %v1594 = vpack.c.b16 %v1585, %v1584
          %v1595 = vpack.c.b16 %v1587, %v1586
          %1604 = vmatprep.subr.bf16.mxu0 0
          %1605 = vmatpush1.bf16.msra.mxu0 %v1595
          %1606 = vmatprep.subr.bf16.mxu0 0
          %1607 = vmatpush1.bf16.msra.mxu0 %v1594
          %1608 = vmatprep.subr.bf16.mxu0 0
          %1609 = vmatpush1.bf16.msra.mxu0 %v1593
          %1610 = vmatprep.subr.bf16.mxu0 0
          %1611 = vmatpush1.bf16.msra.mxu0 %v1592
          %1612 = vmatprep.subr.bf16.mxu0 0
          %1613 = vmatpush1.bf16.msra.mxu0 %v1591
          %1614 = vmatprep.subr.bf16.mxu0 0
          %1615 = vmatpush1.bf16.msra.mxu0 %v1590
          %1616 = vmatprep.subr.bf16.mxu0 0
          %1617 = vmatpush1.bf16.msra.mxu0 %v1589
          %1618 = vmatprep.subr.bf16.mxu0 0
          %1619 = vmatpush1.bf16.msra.mxu0 %v1588
          %1620 = vmatprep.subr.bf16.mxu0 0
          %1621 = vmatpush2.bf16.msra.mxu0 0
          %1622 = vmatprep.subr.bf16.mxu0 0
          %1623 = vmatpush2.bf16.msra.mxu0 0
          %1624 = vmatprep.subr.bf16.mxu0 0
          %1625 = vmatpush2.bf16.msra.mxu0 0
          %1626 = vmatprep.subr.bf16.mxu0 0
          %1627 = vmatpush2.bf16.msra.mxu0 0
          %1628 = vmatprep.subr.bf16.mxu0 0
          %1629 = vmatpush2.bf16.msra.mxu0 0
          %1630 = vmatprep.subr.bf16.mxu0 0
          %1631 = vmatpush2.bf16.msra.mxu0 0
          %1632 = vmatprep.subr.bf16.mxu0 0
          %1633 = vmatpush2.bf16.msra.mxu0 0
          %1634 = vmatprep.subr.bf16.mxu0 0
          %1635 = vmatpush2.bf16.msra.mxu0 0
          %1636 = vmatprep.mubr.bf16.mxu0 0
          %1637 = vmatmul.mubr.bf16.gmra.mxu0 %v1459
          %v1638 = vpop.f32.mrf.mxu0
          %v1639 = vadd.f32 %v1550, %v1638
          %v1640 = vpop.f32.mrf.mxu0
          %v1641 = vpop.f32.mrf.mxu0
          %v1642 = vadd.f32 %v1553, %v1641
          %v1643 = vpop.f32.mrf.mxu0
          %1644 = vdwg.mxu0
          %s1645 = smul.addr %s1182, 4
          %s1646 = scalar_lea.vmem [#allocation15], %s1645
          %v1647 = vld [vmem:[%s1646] sm:$0xf]
          %v1648 = vld [vmem:[%s1646 + $0x4] sm:$0xf]
          %v1649 = vld [vmem:[%s1646 + $0x8] sm:$0xf]
          %v1650 = vld [vmem:[%s1646 + $0xc] sm:$0xf]
          %v1651 = vld [vmem:[%s1646 + $0x10] sm:$0xf]
          %v1652 = vld [vmem:[%s1646 + $0x14] sm:$0xf]
          %v1653 = vld [vmem:[%s1646 + $0x18] sm:$0xf]
          %v1654 = vld [vmem:[%s1646 + $0x1c] sm:$0xf]
          %v1655 = vld [vmem:[%s1646 + $0x20] sm:$0xf]
          %v1656 = vld [vmem:[%s1646 + $0x24] sm:$0xf]
          %v1657 = vld [vmem:[%s1646 + $0x28] sm:$0xf]
          %v1658 = vld [vmem:[%s1646 + $0x2c] sm:$0xf]
          %v1659 = vld [vmem:[%s1646 + $0x30] sm:$0xf]
          %v1660 = vld [vmem:[%s1646 + $0x34] sm:$0xf]
          %v1661 = vld [vmem:[%s1646 + $0x38] sm:$0xf]
          %v1662 = vld [vmem:[%s1646 + $0x3c] sm:$0xf]
          %s1663 = smul.addr %s1202, 4
          %s1664 = scalar_lea.vmem [#allocation15], %s1663
          %v1665 = vld [vmem:[%s1664] sm:$0xf]
          %v1666 = vld [vmem:[%s1664 + $0x4] sm:$0xf]
          %v1667 = vld [vmem:[%s1664 + $0x8] sm:$0xf]
          %v1668 = vld [vmem:[%s1664 + $0xc] sm:$0xf]
          %v1669 = vld [vmem:[%s1664 + $0x10] sm:$0xf]
          %v1670 = vld [vmem:[%s1664 + $0x14] sm:$0xf]
          %v1671 = vld [vmem:[%s1664 + $0x18] sm:$0xf]
          %v1672 = vld [vmem:[%s1664 + $0x1c] sm:$0xf]
          %v1673 = vld [vmem:[%s1664 + $0x20] sm:$0xf]
          %v1674 = vld [vmem:[%s1664 + $0x24] sm:$0xf]
          %v1675 = vld [vmem:[%s1664 + $0x28] sm:$0xf]
          %v1676 = vld [vmem:[%s1664 + $0x2c] sm:$0xf]
          %v1677 = vld [vmem:[%s1664 + $0x30] sm:$0xf]
          %v1678 = vld [vmem:[%s1664 + $0x34] sm:$0xf]
          %v1679 = vld [vmem:[%s1664 + $0x38] sm:$0xf]
          %v1680 = vld [vmem:[%s1664 + $0x3c] sm:$0xf]
          %v1683 = vrot.slane %v1639, 7
          %v1684 = vrot.slane %v1642, 7
          %v1685 = vsel %vm732, %v1683, %v1684
          %v1688 = vsel %vm732, 0.0, %v1683
          %v1689 = vpack.c.bf16 %v1685, %v1688
          %v1690 = vrot.slane %v1639, 1
          %v1691 = vrot.slane %v1642, 1
          %v1692 = vsel %vm966, %v1690, %v1691
          %v1695 = vsel %vm966, %v1691, 0.0
          %v1696 = vpack.c.bf16 %v1695, %v1692
          %v1713 = vunpack.c.l.b16 %v1665
          %v1714 = vunpack.c.l.b16 %v1666
          %v1715 = vunpack.c.l.b16 %v1667
          %v1716 = vunpack.c.l.b16 %v1668
          %v1717 = vunpack.c.l.b16 %v1669
          %v1718 = vunpack.c.l.b16 %v1670
          %v1719 = vunpack.c.l.b16 %v1671
          %v1720 = vunpack.c.l.b16 %v1672
          %v1721 = vunpack.c.l.b16 %v1673
          %v1722 = vunpack.c.l.b16 %v1674
          %v1723 = vunpack.c.l.b16 %v1675
          %v1724 = vunpack.c.l.b16 %v1676
          %v1725 = vunpack.c.l.b16 %v1677
          %v1726 = vunpack.c.l.b16 %v1678
          %v1727 = vunpack.c.l.b16 %v1679
          %v1728 = vunpack.c.l.b16 %v1680
          %v1729 = vpack.c.b16 %v1714, %v1713
          %v1730 = vpack.c.b16 %v1716, %v1715
          %v1731 = vpack.c.b16 %v1718, %v1717
          %v1732 = vpack.c.b16 %v1720, %v1719
          %v1733 = vpack.c.b16 %v1722, %v1721
          %v1734 = vpack.c.b16 %v1724, %v1723
          %v1735 = vpack.c.b16 %v1726, %v1725
          %v1736 = vpack.c.b16 %v1728, %v1727
          %1745 = vmatprep.subr.bf16.mxu0 0
          %1746 = vmatpush1.bf16.msra.mxu0 %v1736
          %1747 = vmatprep.subr.bf16.mxu0 0
          %1748 = vmatpush1.bf16.msra.mxu0 %v1735
          %1749 = vmatprep.subr.bf16.mxu0 0
          %1750 = vmatpush1.bf16.msra.mxu0 %v1734
          %1751 = vmatprep.subr.bf16.mxu0 0
          %1752 = vmatpush1.bf16.msra.mxu0 %v1733
          %1753 = vmatprep.subr.bf16.mxu0 0
          %1754 = vmatpush1.bf16.msra.mxu0 %v1732
          %1755 = vmatprep.subr.bf16.mxu0 0
          %1756 = vmatpush1.bf16.msra.mxu0 %v1731
          %1757 = vmatprep.subr.bf16.mxu0 0
          %1758 = vmatpush1.bf16.msra.mxu0 %v1730
          %1759 = vmatprep.subr.bf16.mxu0 0
          %1760 = vmatpush1.bf16.msra.mxu0 %v1729
          %1761 = vmatprep.subr.bf16.mxu0 0
          %1762 = vmatpush2.bf16.msra.mxu0 0
          %1763 = vmatprep.subr.bf16.mxu0 0
          %1764 = vmatpush2.bf16.msra.mxu0 0
          %1765 = vmatprep.subr.bf16.mxu0 0
          %1766 = vmatpush2.bf16.msra.mxu0 0
          %1767 = vmatprep.subr.bf16.mxu0 0
          %1768 = vmatpush2.bf16.msra.mxu0 0
          %1769 = vmatprep.subr.bf16.mxu0 0
          %1770 = vmatpush2.bf16.msra.mxu0 0
          %1771 = vmatprep.subr.bf16.mxu0 0
          %1772 = vmatpush2.bf16.msra.mxu0 0
          %1773 = vmatprep.subr.bf16.mxu0 0
          %1774 = vmatpush2.bf16.msra.mxu0 0
          %1775 = vmatprep.subr.bf16.mxu0 0
          %1776 = vmatpush2.bf16.msra.mxu0 0
          %1777 = vmatprep.mubr.bf16.mxu0 0
          %1778 = vmatmul.mubr.bf16.gmra.mxu0 %v1696
          %v1779 = vpop.f32.mrf.mxu0
          %v1780 = vadd.f32 0.0, %v1779
          %v1781 = vpop.f32.mrf.mxu0
          %v1782 = vpop.f32.mrf.mxu0
          %v1783 = vadd.f32 0.0, %v1782
          %v1784 = vpop.f32.mrf.mxu0
          %1785 = vdwg.mxu0
          %v1802 = vunpack.c.l.b16 %v1647
          %v1803 = vunpack.c.l.b16 %v1648
          %v1804 = vunpack.c.l.b16 %v1649
          %v1805 = vunpack.c.l.b16 %v1650
          %v1806 = vunpack.c.l.b16 %v1651
          %v1807 = vunpack.c.l.b16 %v1652
          %v1808 = vunpack.c.l.b16 %v1653
          %v1809 = vunpack.c.l.b16 %v1654
          %v1810 = vunpack.c.l.b16 %v1655
          %v1811 = vunpack.c.l.b16 %v1656
          %v1812 = vunpack.c.l.b16 %v1657
          %v1813 = vunpack.c.l.b16 %v1658
          %v1814 = vunpack.c.l.b16 %v1659
          %v1815 = vunpack.c.l.b16 %v1660
          %v1816 = vunpack.c.l.b16 %v1661
          %v1817 = vunpack.c.l.b16 %v1662
          %v1818 = vpack.c.b16 %v1803, %v1802
          %v1819 = vpack.c.b16 %v1805, %v1804
          %v1820 = vpack.c.b16 %v1807, %v1806
          %v1821 = vpack.c.b16 %v1809, %v1808
          %v1822 = vpack.c.b16 %v1811, %v1810
          %v1823 = vpack.c.b16 %v1813, %v1812
          %v1824 = vpack.c.b16 %v1815, %v1814
          %v1825 = vpack.c.b16 %v1817, %v1816
          %1834 = vmatprep.subr.bf16.mxu0 0
          %1835 = vmatpush1.bf16.msra.mxu0 %v1825
          %1836 = vmatprep.subr.bf16.mxu0 0
          %1837 = vmatpush1.bf16.msra.mxu0 %v1824
          %1838 = vmatprep.subr.bf16.mxu0 0
          %1839 = vmatpush1.bf16.msra.mxu0 %v1823
          %1840 = vmatprep.subr.bf16.mxu0 0
          %1841 = vmatpush1.bf16.msra.mxu0 %v1822
          %1842 = vmatprep.subr.bf16.mxu0 0
          %1843 = vmatpush1.bf16.msra.mxu0 %v1821
          %1844 = vmatprep.subr.bf16.mxu0 0
          %1845 = vmatpush1.bf16.msra.mxu0 %v1820
          %1846 = vmatprep.subr.bf16.mxu0 0
          %1847 = vmatpush1.bf16.msra.mxu0 %v1819
          %1848 = vmatprep.subr.bf16.mxu0 0
          %1849 = vmatpush1.bf16.msra.mxu0 %v1818
          %1850 = vmatprep.subr.bf16.mxu0 0
          %1851 = vmatpush2.bf16.msra.mxu0 0
          %1852 = vmatprep.subr.bf16.mxu0 0
          %1853 = vmatpush2.bf16.msra.mxu0 0
          %1854 = vmatprep.subr.bf16.mxu0 0
          %1855 = vmatpush2.bf16.msra.mxu0 0
          %1856 = vmatprep.subr.bf16.mxu0 0
          %1857 = vmatpush2.bf16.msra.mxu0 0
          %1858 = vmatprep.subr.bf16.mxu0 0
          %1859 = vmatpush2.bf16.msra.mxu0 0
          %1860 = vmatprep.subr.bf16.mxu0 0
          %1861 = vmatpush2.bf16.msra.mxu0 0
          %1862 = vmatprep.subr.bf16.mxu0 0
          %1863 = vmatpush2.bf16.msra.mxu0 0
          %1864 = vmatprep.subr.bf16.mxu0 0
          %1865 = vmatpush2.bf16.msra.mxu0 0
          %1866 = vmatprep.mubr.bf16.mxu0 0
          %1867 = vmatmul.mubr.bf16.gmra.mxu0 %v1689
          %v1868 = vpop.f32.mrf.mxu0
          %v1869 = vadd.f32 %v1780, %v1868
          %v1870 = vpop.f32.mrf.mxu0
          %v1871 = vpop.f32.mrf.mxu0
          %v1872 = vadd.f32 %v1783, %v1871
          %v1873 = vpop.f32.mrf.mxu0
          %1874 = vdwg.mxu0
          %v1875 = vmax.f32 %v1869, 0.0
          %v1876 = vmax.f32 %v1872, 0.0
          %s1877 = scalar_lea.vmem %s8, %s1168
          %v1878 = vld [vmem:[%s1877] sm:$0x1]
          %v1880 = vlaneseq
          %v1881 = vshrl.u32 %v1880, 7
          %v1882 = vsub.s32 0, %v1881
          %v1883 = vrot.slane %v1878, %v1882
          %v1885 = vmul.f32 %v1875, %v1883
          %v1886 = vmul.f32 %v1876, %v1883
          %s1887 = scalar_lea.vmem %s9, %s1168
          %v1888 = vld [vmem:[%s1887] sm:$0x1]
          %v1890 = vlaneseq
          %v1891 = vshrl.u32 %v1890, 7
          %v1892 = vsub.s32 0, %v1891
          %v1893 = vrot.slane %v1888, %v1892
          %v1895 = vadd.f32 %v1885, %v1893
          %v1896 = vadd.f32 %v1886, %v1893
          %1897 = vst [vmem:[#allocation2] sm:$0xff] %v1895
          %1898 = vst [vmem:[#allocation2 + $0x8] sm:$0xff] %v1896
          %1899 = vst [vmem:[#allocation3] sm:$0xff] %v1895
          %1900 = vst [vmem:[#allocation3 + $0x8] sm:$0xff] %v1896
        $region129: #{tdnnf_forward.1} parent=83 // loop_footer
          %s1172 = sadd.s32 1, %s1168
        $region130: #{tdnnf_forward.1} parent=83 // loop_footer_branch
          %1167 = sbr.rel target = $region126
        $region131: #{tdnnf_forward.1} parent=83 // loop_exit
          _
        %v1901 = vld [vmem:[#allocation2] sm:$0xff]
        %v1902 = vld [vmem:[#allocation2 + $0x8] sm:$0xff]
        %v1903 = vpack.c.bf16 %v1902, %v1901
        %v1904 = vld [vmem:[#allocation16] sm:$0xf]
        %v1905 = vld [vmem:[#allocation16 + $0x4] sm:$0xf]
        %v1906 = vld [vmem:[#allocation16 + $0x8] sm:$0xf]
        %v1907 = vld [vmem:[#allocation16 + $0xc] sm:$0xf]
        %v1908 = vld [vmem:[#allocation16 + $0x10] sm:$0xf]
        %v1909 = vld [vmem:[#allocation16 + $0x14] sm:$0xf]
        %v1910 = vld [vmem:[#allocation16 + $0x18] sm:$0xf]
        %v1911 = vld [vmem:[#allocation16 + $0x1c] sm:$0xf]
        %v1912 = vld [vmem:[#allocation16 + $0x20] sm:$0xf]
        %v1913 = vld [vmem:[#allocation16 + $0x24] sm:$0xf]
        %v1914 = vld [vmem:[#allocation16 + $0x28] sm:$0xf]
        %v1915 = vld [vmem:[#allocation16 + $0x2c] sm:$0xf]
        %v1916 = vld [vmem:[#allocation16 + $0x30] sm:$0xf]
        %v1917 = vld [vmem:[#allocation16 + $0x34] sm:$0xf]
        %v1918 = vld [vmem:[#allocation16 + $0x38] sm:$0xf]
        %v1919 = vld [vmem:[#allocation16 + $0x3c] sm:$0xf]
        %v1920 = vld [vmem:[#allocation18] sm:$0x1]
        %v1922 = vlaneseq
        %v1923 = vshrl.u32 %v1922, 7
        %v1924 = vsub.s32 0, %v1923
        %v1925 = vrot.slane %v1920, %v1924
        %v1943 = vunpack.c.l.b16 %v1904
        %v1944 = vunpack.c.l.b16 %v1905
        %v1945 = vunpack.c.l.b16 %v1906
        %v1946 = vunpack.c.l.b16 %v1907
        %v1947 = vunpack.c.l.b16 %v1908
        %v1948 = vunpack.c.l.b16 %v1909
        %v1949 = vunpack.c.l.b16 %v1910
        %v1950 = vunpack.c.l.b16 %v1911
        %v1951 = vunpack.c.l.b16 %v1912
        %v1952 = vunpack.c.l.b16 %v1913
        %v1953 = vunpack.c.l.b16 %v1914
        %v1954 = vunpack.c.l.b16 %v1915
        %v1955 = vunpack.c.l.b16 %v1916
        %v1956 = vunpack.c.l.b16 %v1917
        %v1957 = vunpack.c.l.b16 %v1918
        %v1958 = vunpack.c.l.b16 %v1919
        %v1959 = vpack.c.b16 %v1944, %v1943
        %v1960 = vpack.c.b16 %v1946, %v1945
        %v1961 = vpack.c.b16 %v1948, %v1947
        %v1962 = vpack.c.b16 %v1950, %v1949
        %v1963 = vpack.c.b16 %v1952, %v1951
        %v1964 = vpack.c.b16 %v1954, %v1953
        %v1965 = vpack.c.b16 %v1956, %v1955
        %v1966 = vpack.c.b16 %v1958, %v1957
        %1975 = vmatprep.subr.bf16.mxu0 0
        %1976 = vmatpush1.bf16.msra.mxu0 %v1966
        %1977 = vmatprep.subr.bf16.mxu0 0
        %1978 = vmatpush1.bf16.msra.mxu0 %v1965
        %1979 = vmatprep.subr.bf16.mxu0 0
        %1980 = vmatpush1.bf16.msra.mxu0 %v1964
        %1981 = vmatprep.subr.bf16.mxu0 0
        %1982 = vmatpush1.bf16.msra.mxu0 %v1963
        %1983 = vmatprep.subr.bf16.mxu0 0
        %1984 = vmatpush1.bf16.msra.mxu0 %v1962
        %1985 = vmatprep.subr.bf16.mxu0 0
        %1986 = vmatpush1.bf16.msra.mxu0 %v1961
        %1987 = vmatprep.subr.bf16.mxu0 0
        %1988 = vmatpush1.bf16.msra.mxu0 %v1960
        %1989 = vmatprep.subr.bf16.mxu0 0
        %1990 = vmatpush1.bf16.msra.mxu0 %v1959
        %1991 = vmatprep.subr.bf16.mxu0 0
        %1992 = vmatpush2.bf16.msra.mxu0 0
        %1993 = vmatprep.subr.bf16.mxu0 0
        %1994 = vmatpush2.bf16.msra.mxu0 0
        %1995 = vmatprep.subr.bf16.mxu0 0
        %1996 = vmatpush2.bf16.msra.mxu0 0
        %1997 = vmatprep.subr.bf16.mxu0 0
        %1998 = vmatpush2.bf16.msra.mxu0 0
        %1999 = vmatprep.subr.bf16.mxu0 0
        %2000 = vmatpush2.bf16.msra.mxu0 0
        %2001 = vmatprep.subr.bf16.mxu0 0
        %2002 = vmatpush2.bf16.msra.mxu0 0
        %2003 = vmatprep.subr.bf16.mxu0 0
        %2004 = vmatpush2.bf16.msra.mxu0 0
        %2005 = vmatprep.subr.bf16.mxu0 0
        %2006 = vmatpush2.bf16.msra.mxu0 0
        %2007 = vmatprep.mubr.bf16.mxu0 0
        %2008 = vmatmul.mubr.bf16.gmra.mxu0 %v1903
        %v2009 = vpop.f32.mrf.mxu0
        %v2010 = vadd.f32 %v1925, %v2009
        %v2011 = vpop.f32.mrf.mxu0
        %v2012 = vpop.f32.mrf.mxu0
        %v2013 = vadd.f32 %v1925, %v2012
        %v2014 = vpop.f32.mrf.mxu0
        %2015 = vdwg.mxu0
        %v2016 = vpack.c.bf16 %v2013, %v2010
        %v2017 = vld [vmem:[#allocation19] sm:$0xf]
        %v2018 = vld [vmem:[#allocation19 + $0x4] sm:$0xf]
        %v2019 = vld [vmem:[#allocation19 + $0x8] sm:$0xf]
        %v2020 = vld [vmem:[#allocation19 + $0xc] sm:$0xf]
        %v2021 = vld [vmem:[#allocation19 + $0x10] sm:$0xf]
        %v2022 = vld [vmem:[#allocation19 + $0x14] sm:$0xf]
        %v2023 = vld [vmem:[#allocation19 + $0x18] sm:$0xf]
        %v2024 = vld [vmem:[#allocation19 + $0x1c] sm:$0xf]
        %v2025 = vld [vmem:[#allocation19 + $0x20] sm:$0xf]
        %v2026 = vld [vmem:[#allocation19 + $0x24] sm:$0xf]
        %v2027 = vld [vmem:[#allocation19 + $0x28] sm:$0xf]
        %v2028 = vld [vmem:[#allocation19 + $0x2c] sm:$0xf]
        %v2029 = vld [vmem:[#allocation19 + $0x30] sm:$0xf]
        %v2030 = vld [vmem:[#allocation19 + $0x34] sm:$0xf]
        %v2031 = vld [vmem:[#allocation19 + $0x38] sm:$0xf]
        %v2032 = vld [vmem:[#allocation19 + $0x3c] sm:$0xf]
        %v2033 = vld [vmem:[%s13] sm:$0x1]
        %v2035 = vlaneseq
        %v2036 = vshrl.u32 %v2035, 7
        %v2037 = vsub.s32 0, %v2036
        %v2038 = vrot.slane %v2033, %v2037
        %v2056 = vunpack.c.l.b16 %v2017
        %v2057 = vunpack.c.l.b16 %v2018
        %v2058 = vunpack.c.l.b16 %v2019
        %v2059 = vunpack.c.l.b16 %v2020
        %v2060 = vunpack.c.l.b16 %v2021
        %v2061 = vunpack.c.l.b16 %v2022
        %v2062 = vunpack.c.l.b16 %v2023
        %v2063 = vunpack.c.l.b16 %v2024
        %v2064 = vunpack.c.l.b16 %v2025
        %v2065 = vunpack.c.l.b16 %v2026
        %v2066 = vunpack.c.l.b16 %v2027
        %v2067 = vunpack.c.l.b16 %v2028
        %v2068 = vunpack.c.l.b16 %v2029
        %v2069 = vunpack.c.l.b16 %v2030
        %v2070 = vunpack.c.l.b16 %v2031
        %v2071 = vunpack.c.l.b16 %v2032
        %v2072 = vpack.c.b16 %v2057, %v2056
        %v2073 = vpack.c.b16 %v2059, %v2058
        %v2074 = vpack.c.b16 %v2061, %v2060
        %v2075 = vpack.c.b16 %v2063, %v2062
        %v2076 = vpack.c.b16 %v2065, %v2064
        %v2077 = vpack.c.b16 %v2067, %v2066
        %v2078 = vpack.c.b16 %v2069, %v2068
        %v2079 = vpack.c.b16 %v2071, %v2070
        %2088 = vmatprep.subr.bf16.mxu0 0
        %2089 = vmatpush1.bf16.msra.mxu0 %v2079
        %2090 = vmatprep.subr.bf16.mxu0 0
        %2091 = vmatpush1.bf16.msra.mxu0 %v2078
        %2092 = vmatprep.subr.bf16.mxu0 0
        %2093 = vmatpush1.bf16.msra.mxu0 %v2077
        %2094 = vmatprep.subr.bf16.mxu0 0
        %2095 = vmatpush1.bf16.msra.mxu0 %v2076
        %2096 = vmatprep.subr.bf16.mxu0 0
        %2097 = vmatpush1.bf16.msra.mxu0 %v2075
        %2098 = vmatprep.subr.bf16.mxu0 0
        %2099 = vmatpush1.bf16.msra.mxu0 %v2074
        %2100 = vmatprep.subr.bf16.mxu0 0
        %2101 = vmatpush1.bf16.msra.mxu0 %v2073
        %2102 = vmatprep.subr.bf16.mxu0 0
        %2103 = vmatpush1.bf16.msra.mxu0 %v2072
        %2104 = vmatprep.subr.bf16.mxu0 0
        %2105 = vmatpush2.bf16.msra.mxu0 0
        %2106 = vmatprep.subr.bf16.mxu0 0
        %2107 = vmatpush2.bf16.msra.mxu0 0
        %2108 = vmatprep.subr.bf16.mxu0 0
        %2109 = vmatpush2.bf16.msra.mxu0 0
        %2110 = vmatprep.subr.bf16.mxu0 0
        %2111 = vmatpush2.bf16.msra.mxu0 0
        %2112 = vmatprep.subr.bf16.mxu0 0
        %2113 = vmatpush2.bf16.msra.mxu0 0
        %2114 = vmatprep.subr.bf16.mxu0 0
        %2115 = vmatpush2.bf16.msra.mxu0 0
        %2116 = vmatprep.subr.bf16.mxu0 0
        %2117 = vmatpush2.bf16.msra.mxu0 0
        %2118 = vmatprep.subr.bf16.mxu0 0
        %2119 = vmatpush2.bf16.msra.mxu0 0
        %2120 = vmatprep.mubr.bf16.mxu0 0
        %2121 = vmatmul.mubr.bf16.gmra.mxu0 %v2016
        %v2122 = vpop.f32.mrf.mxu0
        %v2123 = vadd.f32 %v2038, %v2122
        %v2124 = vpop.f32.mrf.mxu0
        %v2125 = vpop.f32.mrf.mxu0
        %v2126 = vadd.f32 %v2038, %v2125
        %v2127 = vpop.f32.mrf.mxu0
        %2128 = vdwg.mxu0
        %v2129 = vmax.f32 %v2123, 0.0
        %v2130 = vmax.f32 %v2126, 0.0
        %v2131 = vld [vmem:[%s14] sm:$0x1]
        %v2133 = vlaneseq
        %v2134 = vshrl.u32 %v2133, 7
        %v2135 = vsub.s32 0, %v2134
        %v2136 = vrot.slane %v2131, %v2135
        %v2138 = vmul.f32 %v2129, %v2136
        %v2139 = vmul.f32 %v2130, %v2136
        %v2140 = vld [vmem:[%s15] sm:$0x1]
        %v2142 = vlaneseq
        %v2143 = vshrl.u32 %v2142, 7
        %v2144 = vsub.s32 0, %v2143
        %v2145 = vrot.slane %v2140, %v2144
        %v2147 = vadd.f32 %v2138, %v2145
        %v2148 = vadd.f32 %v2139, %v2145
        %2149 = vst [vmem:[%s664] sm:$0xff] %v2147
        %2150 = vst [vmem:[%s664 + $0x8] sm:$0xff] %v2148
        %s2151 = sand.u32 %s387, 1
        %s2152 = scalar_lea.sflag [#allocation6], %s2151
        %s2153 = sand.u32 %s387, 1
        %s2154 = smul.addr %s2153, 16
        %s2155 = scalar_lea.vmem [#allocation21], %s2154
        // Predicated region
        $region132: #{tdnnf_forward.1} parent=83 // pred_check
          %p2156 = pneg %p397
        $region133: #{tdnnf_forward.1} parent=83 // pred_check_branch
          %2158 = sbr.rel (%p2156) target = $region135
        $region134: #{tdnnf_forward.1} parent=83 // pred_region
          %s2160 = ssub.s32 256, 256
          %2161 = vsyncadd %s2152, %s2160
          %s2162 = smul.addr %s38, 2
          %s2163 = smul.addr %s2162, 128
          %s2164 = scalar_lea.hbm %s16, %s2163
          %s2165 = sshll.u32 %s2155, 4
          %s2166 = int_to_ptr.vmem [resolvable:$true] %s2165
          %2171 = dma.vmem_to_hbm [thread:$0]  %s2166, 256, %s2164, %s2152, 128, 128, 8
        $region135: #{tdnnf_forward.1} parent=83 // pred_fallthru
          _
      $region84: #{tdnnf_forward.1} parent=5 // pred_fallthru
        _
      %p2172 = scmp.le.s32.totalorder 2, %s33
      // Predicated region
      $region136: #{tdnnf_forward.1} parent=5 // pred_check
        %p2173 = pneg %p2172
      $region137: #{tdnnf_forward.1} parent=5 // pred_check_branch
        %2175 = sbr.rel (%p2173) target = $region139
      $region138: #{tdnnf_forward.1} parent=5 // pred_region
        %s2176 = ssub.s32 %s33, 2
        // Predicated region
        $region140: #{tdnnf_forward.1} parent=138 // pred_check
          %p2177 = pneg %p403
        $region141: #{tdnnf_forward.1} parent=138 // pred_check_branch
          %2179 = sbr.rel (%p2177) target = $region143
        $region142: #{tdnnf_forward.1} parent=138 // pred_region
          %s2180 = sand.u32 %s388, 1
          %s2181 = scalar_lea.sflag [#allocation6], %s2180
          %s2182 = sand.u32 %s388, 1
          %s2183 = smul.addr %s2182, 16
          %s2184 = scalar_lea.vmem [#allocation21], %s2183
          %2185 = dma.done %s2181, 256
        $region143: #{tdnnf_forward.1} parent=138 // pred_fallthru
          _
      $region139: #{tdnnf_forward.1} parent=5 // pred_fallthru
        _
    $region6: #{tdnnf_forward.1} parent=1 // loop_footer
      %s37 = sadd.s32 1, %s33
    $region7: #{tdnnf_forward.1} parent=1 // loop_footer_branch
      %32 = sbr.rel target = $region3
    $region8: #{tdnnf_forward.1} parent=1 // loop_exit
      _
    %2186 = vsyncpa [#allocation5], 1
    %s2187 = scalar_lea.sflag [#allocation5], 1
    %2188 = vsyncpa %s2187, 1
    %2189 = vsyncpa [#allocation8], 1
    %2190 = vsyncpa [#allocation11], 1
    %2191 = vsyncpa [#allocation14], 1
    %2192 = vsyncpa [#allocation17], 1
    %2193 = vsyncpa [#allocation20], 1
    %2194 = vsyncpa [#allocation6], 1
    %s2195 = scalar_lea.sflag [#allocation6], 1
    %2196 = vsyncpa %s2195, 1

</llo_original>
